<compile_context>
chip_gen: v5e
topology: v5e:2x2
jax: 0.10.0
libtpu: 0.0.40
codegen_flags: <defaults>
</compile_context>

<pallas_src>
import jax
import jax.numpy as jnp
from jax import lax
from jax.experimental import pallas as pl
from jax.experimental.pallas import tpu as pltpu

# ----------------------------- config (small, synthetic) -----------------------------
HIDDEN = 32          # config.hidden_size
FFN_INTER = 64       # config.intermediate_size (MLP)
MAMBA_EXPAND = 2
MAMBA_INTER = MAMBA_EXPAND * HIDDEN   # 64
D_STATE = 16         # config.mamba_d_state
D_CONV = 4           # config.mamba_d_conv
DT_RANK = 8          # config.mamba_dt_rank
EPS = 1e-6           # config.rms_norm_eps
SEQ = 8              # prompt length (per sequence)
NUM_SEQS = 2         # independent prompt sequences (grid "parallel" axis)

BF16 = jnp.bfloat16


# ----------------------------- elementwise helpers (VPU / EUP) -----------------------------

def _silu(x):
    return x * jax.nn.sigmoid(x)


def _softplus(x):
    return jnp.maximum(x, 0.0) + jnp.log1p(jnp.exp(-jnp.abs(x)))


def _rms(x, w):
    var = jnp.mean(x * x, axis=-1, keepdims=True)
    return x * lax.rsqrt(var + EPS) * w


def _mm(a, w):
    # bf16 MXU inputs, f32 accumulation (v6e/v7x throughput; safe numerics).
    return jnp.dot(a.astype(BF16), w, preferred_element_type=jnp.float32)


# ----------------------------- fused decoder-layer kernel -----------------------------

def _make_layer_kernel(has_residual: bool):
    """Builds the fused JambaMambaDecoderLayer kernel body (one sequence per grid step)."""

    def kernel(*refs):
        if has_residual:
            h_ref, r_ref = refs[0], refs[1]
            rest = refs[2:]
        else:
            h_ref, r_ref = refs[0], None
            rest = refs[1:]

        (in_ln_w, preff_ln_w, dt_ln_w, b_ln_w, c_ln_w,
         in_w, conv_w, conv_b, xp_w, dt_w, dt_b, a_t_ref, d_ref, out_w,
         gate_up_w, down_w,
         out_ref, res_ref) = rest

        f32 = jnp.float32
        L = h_ref.shape[0]
        inter = conv_w.shape[1]
        K = conv_w.shape[0]
        nd = dt_ln_w.shape[1]          # dt_rank
        ns = b_ln_w.shape[1]           # d_state

        # ---- input RMSNorm with vLLM fused-residual semantics ----
        resid = h_ref[...]
        if has_residual:
            resid = resid + r_ref[...]
        x = _rms(resid, in_ln_w[...])                                    # (L, H) f32

        # ---- Mamba in_proj: one lane-dense (H, 2*INTER) matmul, static lane split ----
        proj = _mm(x, in_w[...])                                          # (L, 2*INTER) f32
        hs = proj[:, :inter]                                              # x branch
        z = proj[:, inter:]                                               # gate branch

        # ---- causal depthwise conv1d + SiLU: shifted taps via pltpu.roll (XLU) + mask ----
        w_taps = conv_w[...]                                              # loaded once
        row = lax.broadcasted_iota(jnp.int32, (L, inter), 0)              # row index, reused below
        acc = hs * w_taps[K - 1:K, :]                                     # shift-0 tap
        for k in range(K - 1):                                            # static unroll over taps
            shift = K - 1 - k
            tap = pltpu.roll(hs, shift=shift, axis=0)                     # tap[t] = hs[t - shift] (wrapped)
            tap = jnp.where(row >= shift, tap, 0.0)                       # causal zero-padding
            acc = acc + tap * w_taps[k:k + 1, :]
        hs_conv = _silu(acc + conv_b[...])                                # (L, INTER) f32

        # ---- x_proj: single merged matmul, then static lane slices + per-branch RMSNorms ----
        ssm_p = _mm(hs_conv, xp_w[...])                                   # (L, DT_RANK + 2*D_STATE)
        time_step = _rms(ssm_p[:, :nd], dt_ln_w[...])
        b_n = _rms(ssm_p[:, nd:nd + ns], b_ln_w[...])                     # (L, D_STATE)
        c_n = _rms(ssm_p[:, nd + ns:nd + 2 * ns], c_ln_w[...])            # (L, D_STATE)

        # ---- dt_proj (skip_bias_add=True: bias goes inside softplus) ----
        delta = _softplus(_mm(time_step, dt_w[...]) + dt_b[...])          # (L, INTER) f32
        du = delta * hs_conv                                              # (L, INTER)

        # ---- selective scan: exp hoisted (EUP, batched); loop body is pure VPU FMA ----
        a_t = a_t_ref[...]                                                # (D_STATE, INTER) = A^T, f32
        dA = jnp.exp(delta[:, None, :] * a_t[None, :, :])                 # (L, D_STATE, INTER)
        b_t = jnp.transpose(b_n)                                          # (D_STATE, L)
        c_t = jnp.transpose(c_n)                                          # (D_STATE, L)
        h = jnp.zeros((ns, inter), f32)
        y = jnp.zeros((L, inter), f32)                                    # vreg-resident y accumulator
        # TODO(synk): replace static unroll with lax.fori_loop(unroll=4..8) at production L.
        for t in range(L):
            d_bu = b_t[:, t:t + 1] * du[t:t + 1, :]                       # (D_STATE, INTER) outer product (VPU)
            h = dA[t] * h + d_bu                                          # carry: one FMA
            y_t = jnp.sum(c_t[:, t:t + 1] * h, axis=0, keepdims=True)     # (1, INTER) VPU mul + XLU reduce
            y = y + jnp.where(row == t, y_t, 0.0)                         # masked accumulate in registers

        y = y + d_ref[...] * hs_conv                                      # D skip connection
        y = y * _silu(z)                                                  # gate
        mamba_out = _mm(y, out_w[...])                                    # (L, H)

        # ---- pre-FF RMSNorm (fused residual add) ----
        x2_pre = mamba_out + resid
        res_ref[...] = x2_pre
        x2 = _rms(x2_pre, preff_ln_w[...])

        # ---- JambaMLP (num_experts == 1): merged gate_up -> SiluAndMul -> down ----
        gu = _mm(x2, gate_up_w[...])                                      # (L, 2*FFN_INTER) lane-dense
        nf = gu.shape[1] // 2
        out_ref[...] = _mm(_silu(gu[:, :nf]) * gu[:, nf:], down_w[...])   # (L, H), single dense store

    return kernel


# ----------------------------- wrapper -----------------------------

_WEIGHT_ORDER = ("input_ln_w", "pre_ff_ln_w", "dt_ln_w", "b_ln_w", "c_ln_w",
                 "in_w", "conv_w", "conv_b", "xp_w", "dt_proj_w", "dt_proj_b",
                 "A_T", "D", "out_proj_w", "gate_up_w", "down_w")


def _full_spec(arr):
    """Whole array resident in VMEM; constant index_map => DMA'd once across the grid."""
    nd = arr.ndim
    return pl.BlockSpec(arr.shape, lambda *_, n=nd: (0,) * n)


def jamba_mamba_decoder_layer(params, hidden_states, residual=None):
    """hidden_states: (NUM_SEQS, L, HIDDEN) fp32. Returns (hidden_states, residual)."""
    has_residual = residual is not None
    S, L, H = hidden_states.shape

    seq_spec = pl.BlockSpec((None, L, H), lambda s: (s, 0, 0))

    args = [hidden_states]
    in_specs = [seq_spec]
    if has_residual:
        args.append(residual)
        in_specs.append(seq_spec)
    for name in _WEIGHT_ORDER:
        args.append(params[name])
        in_specs.append(_full_spec(params[name]))

    out, res = pl.pallas_call(
        _make_layer_kernel(has_residual),
        grid=(S,),
        out_shape=(jax.ShapeDtypeStruct((S, L, H), jnp.float32),
                   jax.ShapeDtypeStruct((S, L, H), jnp.float32)),
        in_specs=in_specs,
        out_specs=(seq_spec, seq_spec),
        compiler_params=pltpu.CompilerParams(
            dimension_semantics=("parallel",)),   # second TC on v7x; harmless on v5e/v6e
    )(*args)
    return out, res


# ----------------------------- parameters -----------------------------

def init_params(key):
    ks = jax.random.split(key, 10)
    s = 0.05

    def nrm(k, shape, dtype=jnp.float32):
        return (jax.random.normal(k, shape, jnp.float32) * s).astype(dtype)

    p = {}
    # RMSNorm weights (ones), kept f32
    p["input_ln_w"] = jnp.ones((1, HIDDEN), jnp.float32)
    p["pre_ff_ln_w"] = jnp.ones((1, HIDDEN), jnp.float32)
    p["dt_ln_w"] = jnp.ones((1, DT_RANK), jnp.float32)
    p["b_ln_w"] = jnp.ones((1, D_STATE), jnp.float32)
    p["c_ln_w"] = jnp.ones((1, D_STATE), jnp.float32)
    # Mamba mixer (merged projections, pre-transposed so every matmul is x @ W);
    # matmul weights stored bf16 (half the DMA bytes), elementwise params f32.
    p["in_w"] = nrm(ks[0], (HIDDEN, 2 * MAMBA_INTER), BF16)                 # in_proj (x | z)
    p["conv_w"] = nrm(ks[1], (D_CONV, MAMBA_INTER))                         # depthwise taps
    p["conv_b"] = nrm(ks[2], (1, MAMBA_INTER))
    p["xp_w"] = nrm(ks[3], (MAMBA_INTER, DT_RANK + 2 * D_STATE), BF16)      # x_proj (dt | B | C)
    p["dt_proj_w"] = nrm(ks[4], (DT_RANK, MAMBA_INTER), BF16)
    p["dt_proj_b"] = nrm(ks[5], (1, MAMBA_INTER))
    # A loaded as -exp(loaded_weight); stored transposed as (d_state, inter), f32
    p["A_T"] = -jnp.exp(jax.random.normal(ks[6], (D_STATE, MAMBA_INTER), jnp.float32) * 0.5)
    p["D"] = jnp.ones((1, MAMBA_INTER), jnp.float32)
    p["out_proj_w"] = nrm(ks[7], (MAMBA_INTER, HIDDEN), BF16)
    # JambaMLP (num_experts == 1); gate_up merged
    p["gate_up_w"] = nrm(ks[8], (HIDDEN, 2 * FFN_INTER), BF16)              # (gate | up)
    p["down_w"] = nrm(ks[9], (FFN_INTER, HIDDEN), BF16)
    return p


# ----------------------------- main -----------------------------

if __name__ == "__main__":
    key = jax.random.PRNGKey(0)
    k_x, k_p = jax.random.split(key)
    params = init_params(k_p)

    hidden_states = jax.random.normal(k_x, (NUM_SEQS, SEQ, HIDDEN), jnp.float32)

    # layer 0: residual is None
    out, res = jamba_mamba_decoder_layer(params, hidden_states, residual=None)
    # layer 1 (same weights): exercises the fused residual-add path
    out2, res2 = jamba_mamba_decoder_layer(params, out, residual=res)

    jax.block_until_ready((out, res, out2, res2))
    assert out.shape == (NUM_SEQS, SEQ, HIDDEN) and res.shape == (NUM_SEQS, SEQ, HIDDEN)
    assert out2.shape == (NUM_SEQS, SEQ, HIDDEN) and res2.shape == (NUM_SEQS, SEQ, HIDDEN)
    assert bool(jnp.all(jnp.isfinite(out))) and bool(jnp.all(jnp.isfinite(res)))
    assert bool(jnp.all(jnp.isfinite(out2))) and bool(jnp.all(jnp.isfinite(res2)))
    print("KERNEL_OK")
</pallas_src>

<mosaic_0001>
module attributes {stable_mosaic.version = 11 : i64} {
  func.func @kernel(%arg0: i32, %arg1: memref<1x8x32xf32, #tpu.memory_space<vmem>>, %arg2: memref<1x32xf32, #tpu.memory_space<vmem>>, %arg3: memref<1x32xf32, #tpu.memory_space<vmem>>, %arg4: memref<1x8xf32, #tpu.memory_space<vmem>>, %arg5: memref<1x16xf32, #tpu.memory_space<vmem>>, %arg6: memref<1x16xf32, #tpu.memory_space<vmem>>, %arg7: memref<32x128xbf16, #tpu.memory_space<vmem>>, %arg8: memref<4x64xf32, #tpu.memory_space<vmem>>, %arg9: memref<1x64xf32, #tpu.memory_space<vmem>>, %arg10: memref<64x40xbf16, #tpu.memory_space<vmem>>, %arg11: memref<8x64xbf16, #tpu.memory_space<vmem>>, %arg12: memref<1x64xf32, #tpu.memory_space<vmem>>, %arg13: memref<16x64xf32, #tpu.memory_space<vmem>>, %arg14: memref<1x64xf32, #tpu.memory_space<vmem>>, %arg15: memref<64x32xbf16, #tpu.memory_space<vmem>>, %arg16: memref<32x128xbf16, #tpu.memory_space<vmem>>, %arg17: memref<64x32xbf16, #tpu.memory_space<vmem>>, %arg18: memref<1x8x32xf32, #tpu.memory_space<vmem>>, %arg19: memref<1x8x32xf32, #tpu.memory_space<vmem>>) attributes {dimension_semantics = [#tpu.dimension_semantics<parallel>], iteration_bounds = array<i64: 2>, scalar_prefetch = 0 : i64, scratch_operands = 0 : i64, tpu.core_type = #tpu.core_type<tc>, window_params = [{transform_indices = @transform_0, window_bounds = array<i64: 1, 8, 32>}, {pipeline_mode = #tpu.pipeline_mode<synchronous>, transform_indices = @transform_1, window_bounds = array<i64: 1, 32>}, {pipeline_mode = #tpu.pipeline_mode<synchronous>, transform_indices = @transform_2, window_bounds = array<i64: 1, 32>}, {pipeline_mode = #tpu.pipeline_mode<synchronous>, transform_indices = @transform_3, window_bounds = array<i64: 1, 8>}, {pipeline_mode = #tpu.pipeline_mode<synchronous>, transform_indices = @transform_4, window_bounds = array<i64: 1, 16>}, {pipeline_mode = #tpu.pipeline_mode<synchronous>, transform_indices = @transform_5, window_bounds = array<i64: 1, 16>}, {pipeline_mode = #tpu.pipeline_mode<synchronous>, transform_indices = @transform_6, window_bounds = array<i64: 32, 128>}, {pipeline_mode = #tpu.pipeline_mode<synchronous>, transform_indices = @transform_7, window_bounds = array<i64: 4, 64>}, {pipeline_mode = #tpu.pipeline_mode<synchronous>, transform_indices = @transform_8, window_bounds = array<i64: 1, 64>}, {pipeline_mode = #tpu.pipeline_mode<synchronous>, transform_indices = @transform_9, window_bounds = array<i64: 64, 40>}, {pipeline_mode = #tpu.pipeline_mode<synchronous>, transform_indices = @transform_10, window_bounds = array<i64: 8, 64>}, {pipeline_mode = #tpu.pipeline_mode<synchronous>, transform_indices = @transform_11, window_bounds = array<i64: 1, 64>}, {pipeline_mode = #tpu.pipeline_mode<synchronous>, transform_indices = @transform_12, window_bounds = array<i64: 16, 64>}, {pipeline_mode = #tpu.pipeline_mode<synchronous>, transform_indices = @transform_13, window_bounds = array<i64: 1, 64>}, {pipeline_mode = #tpu.pipeline_mode<synchronous>, transform_indices = @transform_14, window_bounds = array<i64: 64, 32>}, {pipeline_mode = #tpu.pipeline_mode<synchronous>, transform_indices = @transform_15, window_bounds = array<i64: 32, 128>}, {pipeline_mode = #tpu.pipeline_mode<synchronous>, transform_indices = @transform_16, window_bounds = array<i64: 64, 32>}, {transform_indices = @transform_17, window_bounds = array<i64: 1, 8, 32>}, {transform_indices = @transform_18, window_bounds = array<i64: 1, 8, 32>}]} {
    %c0 = arith.constant 0 : index
    %c0_0 = arith.constant 0 : index
    %c0_1 = arith.constant 0 : index
    %0 = vector.load %arg1[%c0, %c0_0, %c0_1] : memref<1x8x32xf32, #tpu.memory_space<vmem>>, vector<1x8x32xf32>
    %1 = vector.shape_cast %0 : vector<1x8x32xf32> to vector<8x32xf32>
    %c0_2 = arith.constant 0 : index
    %c0_3 = arith.constant 0 : index
    %2 = vector.load %arg2[%c0_2, %c0_3] : memref<1x32xf32, #tpu.memory_space<vmem>>, vector<1x32xf32>
    %3 = arith.mulf %1, %1 : vector<8x32xf32>
    %cst = arith.constant dense<0.000000e+00> : vector<8xf32>
    %4 = vector.multi_reduction <add>, %3, %cst [1] : vector<8x32xf32> to vector<8xf32>
    %5 = vector.shape_cast %4 : vector<8xf32> to vector<8x1xf32>
    %cst_4 = arith.constant 3.200000e+01 : f32
    %6 = vector.broadcast %cst_4 : f32 to vector<8x1xf32>
    %7 = arith.divf %5, %6 : vector<8x1xf32>
    %cst_5 = arith.constant 9.99999997E-7 : f32
    %8 = vector.broadcast %cst_5 : f32 to vector<8x1xf32>
    %9 = arith.addf %7, %8 : vector<8x1xf32>
    %10 = math.rsqrt %9 : vector<8x1xf32>
    %11 = vector.broadcast %10 : vector<8x1xf32> to vector<8x32xf32>
    %12 = arith.mulf %1, %11 : vector<8x32xf32>
    %13 = vector.broadcast %2 : vector<1x32xf32> to vector<8x32xf32>
    %14 = arith.mulf %12, %13 : vector<8x32xf32>
    %c0_6 = arith.constant 0 : index
    %c0_7 = arith.constant 0 : index
    %15 = vector.load %arg7[%c0_6, %c0_7] : memref<32x128xbf16, #tpu.memory_space<vmem>>, vector<32x128xbf16>
    %16 = arith.truncf %14 : vector<8x32xf32> to vector<8x32xbf16>
    %cst_8 = arith.constant dense<0.000000e+00> : vector<8x128xf32>
    %17 = tpu.matmul %16, %15, %cst_8 {dimension_numbers = #tpu.dot_dimension_numbers<[1], [0], [0], [1], [0, 0, 1, 1], [], []>} : vector<8x32xbf16>, vector<32x128xbf16>, vector<8x128xf32> -> vector<8x128xf32>
    %18 = vector.extract_strided_slice %17 {offsets = [0, 0], sizes = [8, 64], strides = [1, 1]} : vector<8x128xf32> to vector<8x64xf32>
    %19 = vector.extract_strided_slice %17 {offsets = [0, 64], sizes = [8, 64], strides = [1, 1]} : vector<8x128xf32> to vector<8x64xf32>
    %c0_9 = arith.constant 0 : index
    %c0_10 = arith.constant 0 : index
    %20 = vector.load %arg8[%c0_9, %c0_10] : memref<4x64xf32, #tpu.memory_space<vmem>>, vector<4x64xf32>
    %21 = tpu.iota {dimensions = array<i32: 0>} : vector<8x64xi32>
    %22 = vector.extract_strided_slice %20 {offsets = [3, 0], sizes = [1, 64], strides = [1, 1]} : vector<4x64xf32> to vector<1x64xf32>
    %23 = vector.broadcast %22 : vector<1x64xf32> to vector<8x64xf32>
    %24 = arith.mulf %18, %23 : vector<8x64xf32>
    %c3_i32 = arith.constant 3 : i32
    %25 = tpu.dynamic_rotate %18 by %c3_i32 dim 0 : vector<8x64xf32>, i32 -> vector<8x64xf32>
    %c3_i32_11 = arith.constant 3 : i32
    %26 = vector.broadcast %c3_i32_11 : i32 to vector<8x64xi32>
    %27 = arith.cmpi sge, %21, %26 : vector<8x64xi32>
    %cst_12 = arith.constant 0.000000e+00 : f32
    %28 = vector.broadcast %cst_12 : f32 to vector<8x64xf32>
    %29 = arith.select %27, %25, %28 : vector<8x64xi1>, vector<8x64xf32>
    %30 = vector.extract_strided_slice %20 {offsets = [0, 0], sizes = [1, 64], strides = [1, 1]} : vector<4x64xf32> to vector<1x64xf32>
    %31 = vector.broadcast %30 : vector<1x64xf32> to vector<8x64xf32>
    %32 = arith.mulf %29, %31 : vector<8x64xf32>
    %33 = arith.addf %24, %32 : vector<8x64xf32>
    %c2_i32 = arith.constant 2 : i32
    %34 = tpu.dynamic_rotate %18 by %c2_i32 dim 0 : vector<8x64xf32>, i32 -> vector<8x64xf32>
    %c2_i32_13 = arith.constant 2 : i32
    %35 = vector.broadcast %c2_i32_13 : i32 to vector<8x64xi32>
    %36 = arith.cmpi sge, %21, %35 : vector<8x64xi32>
    %cst_14 = arith.constant 0.000000e+00 : f32
    %37 = vector.broadcast %cst_14 : f32 to vector<8x64xf32>
    %38 = arith.select %36, %34, %37 : vector<8x64xi1>, vector<8x64xf32>
    %39 = vector.extract_strided_slice %20 {offsets = [1, 0], sizes = [1, 64], strides = [1, 1]} : vector<4x64xf32> to vector<1x64xf32>
    %40 = vector.broadcast %39 : vector<1x64xf32> to vector<8x64xf32>
    %41 = arith.mulf %38, %40 : vector<8x64xf32>
    %42 = arith.addf %33, %41 : vector<8x64xf32>
    %c1_i32 = arith.constant 1 : i32
    %43 = tpu.dynamic_rotate %18 by %c1_i32 dim 0 : vector<8x64xf32>, i32 -> vector<8x64xf32>
    %c1_i32_15 = arith.constant 1 : i32
    %44 = vector.broadcast %c1_i32_15 : i32 to vector<8x64xi32>
    %45 = arith.cmpi sge, %21, %44 : vector<8x64xi32>
    %cst_16 = arith.constant 0.000000e+00 : f32
    %46 = vector.broadcast %cst_16 : f32 to vector<8x64xf32>
    %47 = arith.select %45, %43, %46 : vector<8x64xi1>, vector<8x64xf32>
    %48 = vector.extract_strided_slice %20 {offsets = [2, 0], sizes = [1, 64], strides = [1, 1]} : vector<4x64xf32> to vector<1x64xf32>
    %49 = vector.broadcast %48 : vector<1x64xf32> to vector<8x64xf32>
    %50 = arith.mulf %47, %49 : vector<8x64xf32>
    %51 = arith.addf %42, %50 : vector<8x64xf32>
    %c0_17 = arith.constant 0 : index
    %c0_18 = arith.constant 0 : index
    %52 = vector.load %arg9[%c0_17, %c0_18] : memref<1x64xf32, #tpu.memory_space<vmem>>, vector<1x64xf32>
    %53 = vector.broadcast %52 : vector<1x64xf32> to vector<8x64xf32>
    %54 = arith.addf %51, %53 : vector<8x64xf32>
    %55 = arith.negf %54 : vector<8x64xf32>
    %56 = math.exp %55 : vector<8x64xf32>
    %cst_19 = arith.constant 1.000000e+00 : f32
    %57 = vector.broadcast %cst_19 : f32 to vector<8x64xf32>
    %58 = arith.addf %57, %56 : vector<8x64xf32>
    %59 = arith.divf %57, %58 : vector<8x64xf32>
    %60 = arith.mulf %54, %59 : vector<8x64xf32>
    %c0_20 = arith.constant 0 : index
    %c0_21 = arith.constant 0 : index
    %61 = vector.load %arg10[%c0_20, %c0_21] : memref<64x40xbf16, #tpu.memory_space<vmem>>, vector<64x40xbf16>
    %62 = arith.truncf %60 : vector<8x64xf32> to vector<8x64xbf16>
    %cst_22 = arith.constant dense<0.000000e+00> : vector<8x40xf32>
    %63 = tpu.matmul %62, %61, %cst_22 {dimension_numbers = #tpu.dot_dimension_numbers<[1], [0], [0], [1], [0, 0, 1, 1], [], []>} : vector<8x64xbf16>, vector<64x40xbf16>, vector<8x40xf32> -> vector<8x40xf32>
    %64 = vector.extract_strided_slice %63 {offsets = [0, 0], sizes = [8, 8], strides = [1, 1]} : vector<8x40xf32> to vector<8x8xf32>
    %c0_23 = arith.constant 0 : index
    %c0_24 = arith.constant 0 : index
    %65 = vector.load %arg4[%c0_23, %c0_24] : memref<1x8xf32, #tpu.memory_space<vmem>>, vector<1x8xf32>
    %66 = arith.mulf %64, %64 : vector<8x8xf32>
    %cst_25 = arith.constant dense<0.000000e+00> : vector<8xf32>
    %67 = vector.multi_reduction <add>, %66, %cst_25 [1] : vector<8x8xf32> to vector<8xf32>
    %68 = vector.shape_cast %67 : vector<8xf32> to vector<8x1xf32>
    %cst_26 = arith.constant 8.000000e+00 : f32
    %69 = vector.broadcast %cst_26 : f32 to vector<8x1xf32>
    %70 = arith.divf %68, %69 : vector<8x1xf32>
    %cst_27 = arith.constant 9.99999997E-7 : f32
    %71 = vector.broadcast %cst_27 : f32 to vector<8x1xf32>
    %72 = arith.addf %70, %71 : vector<8x1xf32>
    %73 = math.rsqrt %72 : vector<8x1xf32>
    %74 = vector.broadcast %73 : vector<8x1xf32> to vector<8x8xf32>
    %75 = arith.mulf %64, %74 : vector<8x8xf32>
    %76 = vector.broadcast %65 : vector<1x8xf32> to vector<8x8xf32>
    %77 = arith.mulf %75, %76 : vector<8x8xf32>
    %78 = vector.extract_strided_slice %63 {offsets = [0, 8], sizes = [8, 16], strides = [1, 1]} : vector<8x40xf32> to vector<8x16xf32>
    %c0_28 = arith.constant 0 : index
    %c0_29 = arith.constant 0 : index
    %79 = vector.load %arg5[%c0_28, %c0_29] : memref<1x16xf32, #tpu.memory_space<vmem>>, vector<1x16xf32>
    %80 = arith.mulf %78, %78 : vector<8x16xf32>
    %cst_30 = arith.constant dense<0.000000e+00> : vector<8xf32>
    %81 = vector.multi_reduction <add>, %80, %cst_30 [1] : vector<8x16xf32> to vector<8xf32>
    %82 = vector.shape_cast %81 : vector<8xf32> to vector<8x1xf32>
    %cst_31 = arith.constant 1.600000e+01 : f32
    %83 = vector.broadcast %cst_31 : f32 to vector<8x1xf32>
    %84 = arith.divf %82, %83 : vector<8x1xf32>
    %cst_32 = arith.constant 9.99999997E-7 : f32
    %85 = vector.broadcast %cst_32 : f32 to vector<8x1xf32>
    %86 = arith.addf %84, %85 : vector<8x1xf32>
    %87 = math.rsqrt %86 : vector<8x1xf32>
    %88 = vector.broadcast %87 : vector<8x1xf32> to vector<8x16xf32>
    %89 = arith.mulf %78, %88 : vector<8x16xf32>
    %90 = vector.broadcast %79 : vector<1x16xf32> to vector<8x16xf32>
    %91 = arith.mulf %89, %90 : vector<8x16xf32>
    %92 = vector.extract_strided_slice %63 {offsets = [0, 24], sizes = [8, 16], strides = [1, 1]} : vector<8x40xf32> to vector<8x16xf32>
    %c0_33 = arith.constant 0 : index
    %c0_34 = arith.constant 0 : index
    %93 = vector.load %arg6[%c0_33, %c0_34] : memref<1x16xf32, #tpu.memory_space<vmem>>, vector<1x16xf32>
    %94 = arith.mulf %92, %92 : vector<8x16xf32>
    %cst_35 = arith.constant dense<0.000000e+00> : vector<8xf32>
    %95 = vector.multi_reduction <add>, %94, %cst_35 [1] : vector<8x16xf32> to vector<8xf32>
    %96 = vector.shape_cast %95 : vector<8xf32> to vector<8x1xf32>
    %cst_36 = arith.constant 1.600000e+01 : f32
    %97 = vector.broadcast %cst_36 : f32 to vector<8x1xf32>
    %98 = arith.divf %96, %97 : vector<8x1xf32>
    %cst_37 = arith.constant 9.99999997E-7 : f32
    %99 = vector.broadcast %cst_37 : f32 to vector<8x1xf32>
    %100 = arith.addf %98, %99 : vector<8x1xf32>
    %101 = math.rsqrt %100 : vector<8x1xf32>
    %102 = vector.broadcast %101 : vector<8x1xf32> to vector<8x16xf32>
    %103 = arith.mulf %92, %102 : vector<8x16xf32>
    %104 = vector.broadcast %93 : vector<1x16xf32> to vector<8x16xf32>
    %105 = arith.mulf %103, %104 : vector<8x16xf32>
    %c0_38 = arith.constant 0 : index
    %c0_39 = arith.constant 0 : index
    %106 = vector.load %arg11[%c0_38, %c0_39] : memref<8x64xbf16, #tpu.memory_space<vmem>>, vector<8x64xbf16>
    %107 = arith.truncf %77 : vector<8x8xf32> to vector<8x8xbf16>
    %cst_40 = arith.constant dense<0.000000e+00> : vector<8x64xf32>
    %108 = tpu.matmul %107, %106, %cst_40 {dimension_numbers = #tpu.dot_dimension_numbers<[1], [0], [0], [1], [0, 0, 1, 1], [], []>} : vector<8x8xbf16>, vector<8x64xbf16>, vector<8x64xf32> -> vector<8x64xf32>
    %c0_41 = arith.constant 0 : index
    %c0_42 = arith.constant 0 : index
    %109 = vector.load %arg12[%c0_41, %c0_42] : memref<1x64xf32, #tpu.memory_space<vmem>>, vector<1x64xf32>
    %110 = vector.broadcast %109 : vector<1x64xf32> to vector<8x64xf32>
    %111 = arith.addf %108, %110 : vector<8x64xf32>
    %cst_43 = arith.constant 0.000000e+00 : f32
    %112 = vector.broadcast %cst_43 : f32 to vector<8x64xf32>
    %113 = arith.maximumf %111, %112 : vector<8x64xf32>
    %114 = math.absf %111 : vector<8x64xf32>
    %cst_44 = arith.constant 0.000000e+00 : f32
    %115 = vector.broadcast %cst_44 : f32 to vector<8x64xf32>
    %116 = arith.subf %115, %114 : vector<8x64xf32>
    %117 = math.exp %116 : vector<8x64xf32>
    %118 = math.log1p %117 : vector<8x64xf32>
    %119 = arith.addf %113, %118 : vector<8x64xf32>
    %120 = arith.mulf %119, %60 : vector<8x64xf32>
    %c0_45 = arith.constant 0 : index
    %c0_46 = arith.constant 0 : index
    %121 = vector.load %arg13[%c0_45, %c0_46] : memref<16x64xf32, #tpu.memory_space<vmem>>, vector<16x64xf32>
    %122 = vector.shape_cast %119 : vector<8x64xf32> to vector<8x1x64xf32>
    %123 = vector.shape_cast %121 : vector<16x64xf32> to vector<1x16x64xf32>
    %124 = vector.broadcast %122 : vector<8x1x64xf32> to vector<8x16x64xf32>
    %125 = vector.broadcast %123 : vector<1x16x64xf32> to vector<8x16x64xf32>
    %126 = arith.mulf %124, %125 : vector<8x16x64xf32>
    %127 = math.exp %126 : vector<8x16x64xf32>
    %128 = tpu.transpose %91, [1, 0] : vector<8x16xf32> -> vector<16x8xf32>
    %129 = tpu.transpose %105, [1, 0] : vector<8x16xf32> -> vector<16x8xf32>
    %cst_47 = arith.constant 0.000000e+00 : f32
    %130 = vector.broadcast %cst_47 : f32 to vector<16x64xf32>
    %cst_48 = arith.constant 0.000000e+00 : f32
    %131 = vector.broadcast %cst_48 : f32 to vector<8x64xf32>
    %132 = vector.extract_strided_slice %128 {offsets = [0, 0], sizes = [16, 1], strides = [1, 1]} : vector<16x8xf32> to vector<16x1xf32>
    %133 = vector.extract_strided_slice %120 {offsets = [0, 0], sizes = [1, 64], strides = [1, 1]} : vector<8x64xf32> to vector<1x64xf32>
    %134 = vector.broadcast %132 : vector<16x1xf32> to vector<16x64xf32>
    %135 = vector.broadcast %133 : vector<1x64xf32> to vector<16x64xf32>
    %136 = arith.mulf %134, %135 : vector<16x64xf32>
    %137 = vector.extract_strided_slice %127 {offsets = [0, 0, 0], sizes = [1, 16, 64], strides = [1, 1, 1]} : vector<8x16x64xf32> to vector<1x16x64xf32>
    %138 = vector.shape_cast %137 : vector<1x16x64xf32> to vector<16x64xf32>
    %139 = arith.mulf %138, %130 : vector<16x64xf32>
    %140 = arith.addf %139, %136 : vector<16x64xf32>
    %141 = vector.extract_strided_slice %129 {offsets = [0, 0], sizes = [16, 1], strides = [1, 1]} : vector<16x8xf32> to vector<16x1xf32>
    %142 = vector.broadcast %141 : vector<16x1xf32> to vector<16x64xf32>
    %143 = arith.mulf %142, %140 : vector<16x64xf32>
    %cst_49 = arith.constant dense<0.000000e+00> : vector<64xf32>
    %144 = vector.multi_reduction <add>, %143, %cst_49 [0] : vector<16x64xf32> to vector<64xf32>
    %145 = vector.shape_cast %144 : vector<64xf32> to vector<1x64xf32>
    %c0_i32 = arith.constant 0 : i32
    %146 = vector.broadcast %c0_i32 : i32 to vector<8x64xi32>
    %147 = arith.cmpi eq, %21, %146 : vector<8x64xi32>
    %cst_50 = arith.constant 0.000000e+00 : f32
    %148 = vector.shape_cast %145 : vector<1x64xf32> to vector<1x64xf32>
    %149 = vector.broadcast %148 : vector<1x64xf32> to vector<8x64xf32>
    %150 = vector.broadcast %cst_50 : f32 to vector<8x64xf32>
    %151 = arith.select %147, %149, %150 : vector<8x64xi1>, vector<8x64xf32>
    %152 = arith.addf %131, %151 : vector<8x64xf32>
    %153 = vector.extract_strided_slice %128 {offsets = [0, 1], sizes = [16, 1], strides = [1, 1]} : vector<16x8xf32> to vector<16x1xf32>
    %154 = vector.extract_strided_slice %120 {offsets = [1, 0], sizes = [1, 64], strides = [1, 1]} : vector<8x64xf32> to vector<1x64xf32>
    %155 = vector.broadcast %153 : vector<16x1xf32> to vector<16x64xf32>
    %156 = vector.broadcast %154 : vector<1x64xf32> to vector<16x64xf32>
    %157 = arith.mulf %155, %156 : vector<16x64xf32>
    %158 = vector.extract_strided_slice %127 {offsets = [1, 0, 0], sizes = [1, 16, 64], strides = [1, 1, 1]} : vector<8x16x64xf32> to vector<1x16x64xf32>
    %159 = vector.shape_cast %158 : vector<1x16x64xf32> to vector<16x64xf32>
    %160 = arith.mulf %159, %140 : vector<16x64xf32>
    %161 = arith.addf %160, %157 : vector<16x64xf32>
    %162 = vector.extract_strided_slice %129 {offsets = [0, 1], sizes = [16, 1], strides = [1, 1]} : vector<16x8xf32> to vector<16x1xf32>
    %163 = vector.broadcast %162 : vector<16x1xf32> to vector<16x64xf32>
    %164 = arith.mulf %163, %161 : vector<16x64xf32>
    %cst_51 = arith.constant dense<0.000000e+00> : vector<64xf32>
    %165 = vector.multi_reduction <add>, %164, %cst_51 [0] : vector<16x64xf32> to vector<64xf32>
    %166 = vector.shape_cast %165 : vector<64xf32> to vector<1x64xf32>
    %c1_i32_52 = arith.constant 1 : i32
    %167 = vector.broadcast %c1_i32_52 : i32 to vector<8x64xi32>
    %168 = arith.cmpi eq, %21, %167 : vector<8x64xi32>
    %cst_53 = arith.constant 0.000000e+00 : f32
    %169 = vector.shape_cast %166 : vector<1x64xf32> to vector<1x64xf32>
    %170 = vector.broadcast %169 : vector<1x64xf32> to vector<8x64xf32>
    %171 = vector.broadcast %cst_53 : f32 to vector<8x64xf32>
    %172 = arith.select %168, %170, %171 : vector<8x64xi1>, vector<8x64xf32>
    %173 = arith.addf %152, %172 : vector<8x64xf32>
    %174 = vector.extract_strided_slice %128 {offsets = [0, 2], sizes = [16, 1], strides = [1, 1]} : vector<16x8xf32> to vector<16x1xf32>
    %175 = vector.extract_strided_slice %120 {offsets = [2, 0], sizes = [1, 64], strides = [1, 1]} : vector<8x64xf32> to vector<1x64xf32>
    %176 = vector.broadcast %174 : vector<16x1xf32> to vector<16x64xf32>
    %177 = vector.broadcast %175 : vector<1x64xf32> to vector<16x64xf32>
    %178 = arith.mulf %176, %177 : vector<16x64xf32>
    %179 = vector.extract_strided_slice %127 {offsets = [2, 0, 0], sizes = [1, 16, 64], strides = [1, 1, 1]} : vector<8x16x64xf32> to vector<1x16x64xf32>
    %180 = vector.shape_cast %179 : vector<1x16x64xf32> to vector<16x64xf32>
    %181 = arith.mulf %180, %161 : vector<16x64xf32>
    %182 = arith.addf %181, %178 : vector<16x64xf32>
    %183 = vector.extract_strided_slice %129 {offsets = [0, 2], sizes = [16, 1], strides = [1, 1]} : vector<16x8xf32> to vector<16x1xf32>
    %184 = vector.broadcast %183 : vector<16x1xf32> to vector<16x64xf32>
    %185 = arith.mulf %184, %182 : vector<16x64xf32>
    %cst_54 = arith.constant dense<0.000000e+00> : vector<64xf32>
    %186 = vector.multi_reduction <add>, %185, %cst_54 [0] : vector<16x64xf32> to vector<64xf32>
    %187 = vector.shape_cast %186 : vector<64xf32> to vector<1x64xf32>
    %c2_i32_55 = arith.constant 2 : i32
    %188 = vector.broadcast %c2_i32_55 : i32 to vector<8x64xi32>
    %189 = arith.cmpi eq, %21, %188 : vector<8x64xi32>
    %cst_56 = arith.constant 0.000000e+00 : f32
    %190 = vector.shape_cast %187 : vector<1x64xf32> to vector<1x64xf32>
    %191 = vector.broadcast %190 : vector<1x64xf32> to vector<8x64xf32>
    %192 = vector.broadcast %cst_56 : f32 to vector<8x64xf32>
    %193 = arith.select %189, %191, %192 : vector<8x64xi1>, vector<8x64xf32>
    %194 = arith.addf %173, %193 : vector<8x64xf32>
    %195 = vector.extract_strided_slice %128 {offsets = [0, 3], sizes = [16, 1], strides = [1, 1]} : vector<16x8xf32> to vector<16x1xf32>
    %196 = vector.extract_strided_slice %120 {offsets = [3, 0], sizes = [1, 64], strides = [1, 1]} : vector<8x64xf32> to vector<1x64xf32>
    %197 = vector.broadcast %195 : vector<16x1xf32> to vector<16x64xf32>
    %198 = vector.broadcast %196 : vector<1x64xf32> to vector<16x64xf32>
    %199 = arith.mulf %197, %198 : vector<16x64xf32>
    %200 = vector.extract_strided_slice %127 {offsets = [3, 0, 0], sizes = [1, 16, 64], strides = [1, 1, 1]} : vector<8x16x64xf32> to vector<1x16x64xf32>
    %201 = vector.shape_cast %200 : vector<1x16x64xf32> to vector<16x64xf32>
    %202 = arith.mulf %201, %182 : vector<16x64xf32>
    %203 = arith.addf %202, %199 : vector<16x64xf32>
    %204 = vector.extract_strided_slice %129 {offsets = [0, 3], sizes = [16, 1], strides = [1, 1]} : vector<16x8xf32> to vector<16x1xf32>
    %205 = vector.broadcast %204 : vector<16x1xf32> to vector<16x64xf32>
    %206 = arith.mulf %205, %203 : vector<16x64xf32>
    %cst_57 = arith.constant dense<0.000000e+00> : vector<64xf32>
    %207 = vector.multi_reduction <add>, %206, %cst_57 [0] : vector<16x64xf32> to vector<64xf32>
    %208 = vector.shape_cast %207 : vector<64xf32> to vector<1x64xf32>
    %c3_i32_58 = arith.constant 3 : i32
    %209 = vector.broadcast %c3_i32_58 : i32 to vector<8x64xi32>
    %210 = arith.cmpi eq, %21, %209 : vector<8x64xi32>
    %cst_59 = arith.constant 0.000000e+00 : f32
    %211 = vector.shape_cast %208 : vector<1x64xf32> to vector<1x64xf32>
    %212 = vector.broadcast %211 : vector<1x64xf32> to vector<8x64xf32>
    %213 = vector.broadcast %cst_59 : f32 to vector<8x64xf32>
    %214 = arith.select %210, %212, %213 : vector<8x64xi1>, vector<8x64xf32>
    %215 = arith.addf %194, %214 : vector<8x64xf32>
    %216 = vector.extract_strided_slice %128 {offsets = [0, 4], sizes = [16, 1], strides = [1, 1]} : vector<16x8xf32> to vector<16x1xf32>
    %217 = vector.extract_strided_slice %120 {offsets = [4, 0], sizes = [1, 64], strides = [1, 1]} : vector<8x64xf32> to vector<1x64xf32>
    %218 = vector.broadcast %216 : vector<16x1xf32> to vector<16x64xf32>
    %219 = vector.broadcast %217 : vector<1x64xf32> to vector<16x64xf32>
    %220 = arith.mulf %218, %219 : vector<16x64xf32>
    %221 = vector.extract_strided_slice %127 {offsets = [4, 0, 0], sizes = [1, 16, 64], strides = [1, 1, 1]} : vector<8x16x64xf32> to vector<1x16x64xf32>
    %222 = vector.shape_cast %221 : vector<1x16x64xf32> to vector<16x64xf32>
    %223 = arith.mulf %222, %203 : vector<16x64xf32>
    %224 = arith.addf %223, %220 : vector<16x64xf32>
    %225 = vector.extract_strided_slice %129 {offsets = [0, 4], sizes = [16, 1], strides = [1, 1]} : vector<16x8xf32> to vector<16x1xf32>
    %226 = vector.broadcast %225 : vector<16x1xf32> to vector<16x64xf32>
    %227 = arith.mulf %226, %224 : vector<16x64xf32>
    %cst_60 = arith.constant dense<0.000000e+00> : vector<64xf32>
    %228 = vector.multi_reduction <add>, %227, %cst_60 [0] : vector<16x64xf32> to vector<64xf32>
    %229 = vector.shape_cast %228 : vector<64xf32> to vector<1x64xf32>
    %c4_i32 = arith.constant 4 : i32
    %230 = vector.broadcast %c4_i32 : i32 to vector<8x64xi32>
    %231 = arith.cmpi eq, %21, %230 : vector<8x64xi32>
    %cst_61 = arith.constant 0.000000e+00 : f32
    %232 = vector.shape_cast %229 : vector<1x64xf32> to vector<1x64xf32>
    %233 = vector.broadcast %232 : vector<1x64xf32> to vector<8x64xf32>
    %234 = vector.broadcast %cst_61 : f32 to vector<8x64xf32>
    %235 = arith.select %231, %233, %234 : vector<8x64xi1>, vector<8x64xf32>
    %236 = arith.addf %215, %235 : vector<8x64xf32>
    %237 = vector.extract_strided_slice %128 {offsets = [0, 5], sizes = [16, 1], strides = [1, 1]} : vector<16x8xf32> to vector<16x1xf32>
    %238 = vector.extract_strided_slice %120 {offsets = [5, 0], sizes = [1, 64], strides = [1, 1]} : vector<8x64xf32> to vector<1x64xf32>
    %239 = vector.broadcast %237 : vector<16x1xf32> to vector<16x64xf32>
    %240 = vector.broadcast %238 : vector<1x64xf32> to vector<16x64xf32>
    %241 = arith.mulf %239, %240 : vector<16x64xf32>
    %242 = vector.extract_strided_slice %127 {offsets = [5, 0, 0], sizes = [1, 16, 64], strides = [1, 1, 1]} : vector<8x16x64xf32> to vector<1x16x64xf32>
    %243 = vector.shape_cast %242 : vector<1x16x64xf32> to vector<16x64xf32>
    %244 = arith.mulf %243, %224 : vector<16x64xf32>
    %245 = arith.addf %244, %241 : vector<16x64xf32>
    %246 = vector.extract_strided_slice %129 {offsets = [0, 5], sizes = [16, 1], strides = [1, 1]} : vector<16x8xf32> to vector<16x1xf32>
    %247 = vector.broadcast %246 : vector<16x1xf32> to vector<16x64xf32>
    %248 = arith.mulf %247, %245 : vector<16x64xf32>
    %cst_62 = arith.constant dense<0.000000e+00> : vector<64xf32>
    %249 = vector.multi_reduction <add>, %248, %cst_62 [0] : vector<16x64xf32> to vector<64xf32>
    %250 = vector.shape_cast %249 : vector<64xf32> to vector<1x64xf32>
    %c5_i32 = arith.constant 5 : i32
    %251 = vector.broadcast %c5_i32 : i32 to vector<8x64xi32>
    %252 = arith.cmpi eq, %21, %251 : vector<8x64xi32>
    %cst_63 = arith.constant 0.000000e+00 : f32
    %253 = vector.shape_cast %250 : vector<1x64xf32> to vector<1x64xf32>
    %254 = vector.broadcast %253 : vector<1x64xf32> to vector<8x64xf32>
    %255 = vector.broadcast %cst_63 : f32 to vector<8x64xf32>
    %256 = arith.select %252, %254, %255 : vector<8x64xi1>, vector<8x64xf32>
    %257 = arith.addf %236, %256 : vector<8x64xf32>
    %258 = vector.extract_strided_slice %128 {offsets = [0, 6], sizes = [16, 1], strides = [1, 1]} : vector<16x8xf32> to vector<16x1xf32>
    %259 = vector.extract_strided_slice %120 {offsets = [6, 0], sizes = [1, 64], strides = [1, 1]} : vector<8x64xf32> to vector<1x64xf32>
    %260 = vector.broadcast %258 : vector<16x1xf32> to vector<16x64xf32>
    %261 = vector.broadcast %259 : vector<1x64xf32> to vector<16x64xf32>
    %262 = arith.mulf %260, %261 : vector<16x64xf32>
    %263 = vector.extract_strided_slice %127 {offsets = [6, 0, 0], sizes = [1, 16, 64], strides = [1, 1, 1]} : vector<8x16x64xf32> to vector<1x16x64xf32>
    %264 = vector.shape_cast %263 : vector<1x16x64xf32> to vector<16x64xf32>
    %265 = arith.mulf %264, %245 : vector<16x64xf32>
    %266 = arith.addf %265, %262 : vector<16x64xf32>
    %267 = vector.extract_strided_slice %129 {offsets = [0, 6], sizes = [16, 1], strides = [1, 1]} : vector<16x8xf32> to vector<16x1xf32>
    %268 = vector.broadcast %267 : vector<16x1xf32> to vector<16x64xf32>
    %269 = arith.mulf %268, %266 : vector<16x64xf32>
    %cst_64 = arith.constant dense<0.000000e+00> : vector<64xf32>
    %270 = vector.multi_reduction <add>, %269, %cst_64 [0] : vector<16x64xf32> to vector<64xf32>
    %271 = vector.shape_cast %270 : vector<64xf32> to vector<1x64xf32>
    %c6_i32 = arith.constant 6 : i32
    %272 = vector.broadcast %c6_i32 : i32 to vector<8x64xi32>
    %273 = arith.cmpi eq, %21, %272 : vector<8x64xi32>
    %cst_65 = arith.constant 0.000000e+00 : f32
    %274 = vector.shape_cast %271 : vector<1x64xf32> to vector<1x64xf32>
    %275 = vector.broadcast %274 : vector<1x64xf32> to vector<8x64xf32>
    %276 = vector.broadcast %cst_65 : f32 to vector<8x64xf32>
    %277 = arith.select %273, %275, %276 : vector<8x64xi1>, vector<8x64xf32>
    %278 = arith.addf %257, %277 : vector<8x64xf32>
    %279 = vector.extract_strided_slice %128 {offsets = [0, 7], sizes = [16, 1], strides = [1, 1]} : vector<16x8xf32> to vector<16x1xf32>
    %280 = vector.extract_strided_slice %120 {offsets = [7, 0], sizes = [1, 64], strides = [1, 1]} : vector<8x64xf32> to vector<1x64xf32>
    %281 = vector.broadcast %279 : vector<16x1xf32> to vector<16x64xf32>
    %282 = vector.broadcast %280 : vector<1x64xf32> to vector<16x64xf32>
    %283 = arith.mulf %281, %282 : vector<16x64xf32>
    %284 = vector.extract_strided_slice %127 {offsets = [7, 0, 0], sizes = [1, 16, 64], strides = [1, 1, 1]} : vector<8x16x64xf32> to vector<1x16x64xf32>
    %285 = vector.shape_cast %284 : vector<1x16x64xf32> to vector<16x64xf32>
    %286 = arith.mulf %285, %266 : vector<16x64xf32>
    %287 = arith.addf %286, %283 : vector<16x64xf32>
    %288 = vector.extract_strided_slice %129 {offsets = [0, 7], sizes = [16, 1], strides = [1, 1]} : vector<16x8xf32> to vector<16x1xf32>
    %289 = vector.broadcast %288 : vector<16x1xf32> to vector<16x64xf32>
    %290 = arith.mulf %289, %287 : vector<16x64xf32>
    %cst_66 = arith.constant dense<0.000000e+00> : vector<64xf32>
    %291 = vector.multi_reduction <add>, %290, %cst_66 [0] : vector<16x64xf32> to vector<64xf32>
    %292 = vector.shape_cast %291 : vector<64xf32> to vector<1x64xf32>
    %c7_i32 = arith.constant 7 : i32
    %293 = vector.broadcast %c7_i32 : i32 to vector<8x64xi32>
    %294 = arith.cmpi eq, %21, %293 : vector<8x64xi32>
    %cst_67 = arith.constant 0.000000e+00 : f32
    %295 = vector.shape_cast %292 : vector<1x64xf32> to vector<1x64xf32>
    %296 = vector.broadcast %295 : vector<1x64xf32> to vector<8x64xf32>
    %297 = vector.broadcast %cst_67 : f32 to vector<8x64xf32>
    %298 = arith.select %294, %296, %297 : vector<8x64xi1>, vector<8x64xf32>
    %299 = arith.addf %278, %298 : vector<8x64xf32>
    %c0_68 = arith.constant 0 : index
    %c0_69 = arith.constant 0 : index
    %300 = vector.load %arg14[%c0_68, %c0_69] : memref<1x64xf32, #tpu.memory_space<vmem>>, vector<1x64xf32>
    %301 = vector.broadcast %300 : vector<1x64xf32> to vector<8x64xf32>
    %302 = arith.mulf %301, %60 : vector<8x64xf32>
    %303 = arith.addf %299, %302 : vector<8x64xf32>
    %304 = arith.negf %19 : vector<8x64xf32>
    %305 = math.exp %304 : vector<8x64xf32>
    %cst_70 = arith.constant 1.000000e+00 : f32
    %306 = vector.broadcast %cst_70 : f32 to vector<8x64xf32>
    %307 = arith.addf %306, %305 : vector<8x64xf32>
    %308 = arith.divf %306, %307 : vector<8x64xf32>
    %309 = arith.mulf %19, %308 : vector<8x64xf32>
    %310 = arith.mulf %303, %309 : vector<8x64xf32>
    %c0_71 = arith.constant 0 : index
    %c0_72 = arith.constant 0 : index
    %311 = vector.load %arg15[%c0_71, %c0_72] : memref<64x32xbf16, #tpu.memory_space<vmem>>, vector<64x32xbf16>
    %312 = arith.truncf %310 : vector<8x64xf32> to vector<8x64xbf16>
    %cst_73 = arith.constant dense<0.000000e+00> : vector<8x32xf32>
    %313 = tpu.matmul %312, %311, %cst_73 {dimension_numbers = #tpu.dot_dimension_numbers<[1], [0], [0], [1], [0, 0, 1, 1], [], []>} : vector<8x64xbf16>, vector<64x32xbf16>, vector<8x32xf32> -> vector<8x32xf32>
    %314 = arith.addf %313, %1 : vector<8x32xf32>
    %c0_74 = arith.constant 0 : index
    %c0_75 = arith.constant 0 : index
    %c0_76 = arith.constant 0 : index
    %315 = vector.load %arg19[%c0_74, %c0_75, %c0_76] : memref<1x8x32xf32, #tpu.memory_space<vmem>>, vector<1x8x32xf32>
    %316 = vector.shape_cast %315 : vector<1x8x32xf32> to vector<8x32xf32>
    %317 = vector.shape_cast %314 : vector<8x32xf32> to vector<1x8x32xf32>
    tpu.vector_store %arg19[%c0_74, %c0_75, %c0_76], %317 {strides = array<i32>} : memref<1x8x32xf32, #tpu.memory_space<vmem>>, vector<1x8x32xf32>,
    %c0_77 = arith.constant 0 : index
    %c0_78 = arith.constant 0 : index
    %318 = vector.load %arg3[%c0_77, %c0_78] : memref<1x32xf32, #tpu.memory_space<vmem>>, vector<1x32xf32>
    %319 = arith.mulf %314, %314 : vector<8x32xf32>
    %cst_79 = arith.constant dense<0.000000e+00> : vector<8xf32>
    %320 = vector.multi_reduction <add>, %319, %cst_79 [1] : vector<8x32xf32> to vector<8xf32>
    %321 = vector.shape_cast %320 : vector<8xf32> to vector<8x1xf32>
    %cst_80 = arith.constant 3.200000e+01 : f32
    %322 = vector.broadcast %cst_80 : f32 to vector<8x1xf32>
    %323 = arith.divf %321, %322 : vector<8x1xf32>
    %cst_81 = arith.constant 9.99999997E-7 : f32
    %324 = vector.broadcast %cst_81 : f32 to vector<8x1xf32>
    %325 = arith.addf %323, %324 : vector<8x1xf32>
    %326 = math.rsqrt %325 : vector<8x1xf32>
    %327 = vector.broadcast %326 : vector<8x1xf32> to vector<8x32xf32>
    %328 = arith.mulf %314, %327 : vector<8x32xf32>
    %329 = vector.broadcast %318 : vector<1x32xf32> to vector<8x32xf32>
    %330 = arith.mulf %328, %329 : vector<8x32xf32>
    %c0_82 = arith.constant 0 : index
    %c0_83 = arith.constant 0 : index
    %331 = vector.load %arg16[%c0_82, %c0_83] : memref<32x128xbf16, #tpu.memory_space<vmem>>, vector<32x128xbf16>
    %332 = arith.truncf %330 : vector<8x32xf32> to vector<8x32xbf16>
    %cst_84 = arith.constant dense<0.000000e+00> : vector<8x128xf32>
    %333 = tpu.matmul %332, %331, %cst_84 {dimension_numbers = #tpu.dot_dimension_numbers<[1], [0], [0], [1], [0, 0, 1, 1], [], []>} : vector<8x32xbf16>, vector<32x128xbf16>, vector<8x128xf32> -> vector<8x128xf32>
    %334 = vector.extract_strided_slice %333 {offsets = [0, 0], sizes = [8, 64], strides = [1, 1]} : vector<8x128xf32> to vector<8x64xf32>
    %335 = arith.negf %334 : vector<8x64xf32>
    %336 = math.exp %335 : vector<8x64xf32>
    %cst_85 = arith.constant 1.000000e+00 : f32
    %337 = vector.broadcast %cst_85 : f32 to vector<8x64xf32>
    %338 = arith.addf %337, %336 : vector<8x64xf32>
    %339 = arith.divf %337, %338 : vector<8x64xf32>
    %340 = arith.mulf %334, %339 : vector<8x64xf32>
    %341 = vector.extract_strided_slice %333 {offsets = [0, 64], sizes = [8, 64], strides = [1, 1]} : vector<8x128xf32> to vector<8x64xf32>
    %342 = arith.mulf %340, %341 : vector<8x64xf32>
    %c0_86 = arith.constant 0 : index
    %c0_87 = arith.constant 0 : index
    %343 = vector.load %arg17[%c0_86, %c0_87] : memref<64x32xbf16, #tpu.memory_space<vmem>>, vector<64x32xbf16>
    %344 = arith.truncf %342 : vector<8x64xf32> to vector<8x64xbf16>
    %cst_88 = arith.constant dense<0.000000e+00> : vector<8x32xf32>
    %345 = tpu.matmul %344, %343, %cst_88 {dimension_numbers = #tpu.dot_dimension_numbers<[1], [0], [0], [1], [0, 0, 1, 1], [], []>} : vector<8x64xbf16>, vector<64x32xbf16>, vector<8x32xf32> -> vector<8x32xf32>
    %c0_89 = arith.constant 0 : index
    %c0_90 = arith.constant 0 : index
    %c0_91 = arith.constant 0 : index
    %346 = vector.load %arg18[%c0_89, %c0_90, %c0_91] : memref<1x8x32xf32, #tpu.memory_space<vmem>>, vector<1x8x32xf32>
    %347 = vector.shape_cast %346 : vector<1x8x32xf32> to vector<8x32xf32>
    %348 = vector.shape_cast %345 : vector<8x32xf32> to vector<1x8x32xf32>
    tpu.vector_store %arg18[%c0_89, %c0_90, %c0_91], %348 {strides = array<i32>} : memref<1x8x32xf32, #tpu.memory_space<vmem>>, vector<1x8x32xf32>,
    return
  }
  func.func @transform_0(%arg0: i32) -> (i32, i32, i32) {
    %c0_i32 = arith.constant 0 : i32
    %c0_i32_0 = arith.constant 0 : i32
    %c0_i32_1 = arith.constant 0 : i32
    return %arg0, %c0_i32, %c0_i32_0 : i32, i32, i32
  }
  func.func @transform_1(%arg0: i32) -> (i32, i32) {
    %c0_i32 = arith.constant 0 : i32
    %c0_i32_0 = arith.constant 0 : i32
    %c0_i32_1 = arith.constant 0 : i32
    return %c0_i32, %c0_i32_0 : i32, i32
  }
  func.func @transform_2(%arg0: i32) -> (i32, i32) {
    %c0_i32 = arith.constant 0 : i32
    %c0_i32_0 = arith.constant 0 : i32
    %c0_i32_1 = arith.constant 0 : i32
    return %c0_i32, %c0_i32_0 : i32, i32
  }
  func.func @transform_3(%arg0: i32) -> (i32, i32) {
    %c0_i32 = arith.constant 0 : i32
    %c0_i32_0 = arith.constant 0 : i32
    %c0_i32_1 = arith.constant 0 : i32
    return %c0_i32, %c0_i32_0 : i32, i32
  }
  func.func @transform_4(%arg0: i32) -> (i32, i32) {
    %c0_i32 = arith.constant 0 : i32
    %c0_i32_0 = arith.constant 0 : i32
    %c0_i32_1 = arith.constant 0 : i32
    return %c0_i32, %c0_i32_0 : i32, i32
  }
  func.func @transform_5(%arg0: i32) -> (i32, i32) {
    %c0_i32 = arith.constant 0 : i32
    %c0_i32_0 = arith.constant 0 : i32
    %c0_i32_1 = arith.constant 0 : i32
    return %c0_i32, %c0_i32_0 : i32, i32
  }
  func.func @transform_6(%arg0: i32) -> (i32, i32) {
    %c0_i32 = arith.constant 0 : i32
    %c0_i32_0 = arith.constant 0 : i32
    %c0_i32_1 = arith.constant 0 : i32
    return %c0_i32, %c0_i32_0 : i32, i32
  }
  func.func @transform_7(%arg0: i32) -> (i32, i32) {
    %c0_i32 = arith.constant 0 : i32
    %c0_i32_0 = arith.constant 0 : i32
    %c0_i32_1 = arith.constant 0 : i32
    return %c0_i32, %c0_i32_0 : i32, i32
  }
  func.func @transform_8(%arg0: i32) -> (i32, i32) {
    %c0_i32 = arith.constant 0 : i32
    %c0_i32_0 = arith.constant 0 : i32
    %c0_i32_1 = arith.constant 0 : i32
    return %c0_i32, %c0_i32_0 : i32, i32
  }
  func.func @transform_9(%arg0: i32) -> (i32, i32) {
    %c0_i32 = arith.constant 0 : i32
    %c0_i32_0 = arith.constant 0 : i32
    %c0_i32_1 = arith.constant 0 : i32
    return %c0_i32, %c0_i32_0 : i32, i32
  }
  func.func @transform_10(%arg0: i32) -> (i32, i32) {
    %c0_i32 = arith.constant 0 : i32
    %c0_i32_0 = arith.constant 0 : i32
    %c0_i32_1 = arith.constant 0 : i32
    return %c0_i32, %c0_i32_0 : i32, i32
  }
  func.func @transform_11(%arg0: i32) -> (i32, i32) {
    %c0_i32 = arith.constant 0 : i32
    %c0_i32_0 = arith.constant 0 : i32
    %c0_i32_1 = arith.constant 0 : i32
    return %c0_i32, %c0_i32_0 : i32, i32
  }
  func.func @transform_12(%arg0: i32) -> (i32, i32) {
    %c0_i32 = arith.constant 0 : i32
    %c0_i32_0 = arith.constant 0 : i32
    %c0_i32_1 = arith.constant 0 : i32
    return %c0_i32, %c0_i32_0 : i32, i32
  }
  func.func @transform_13(%arg0: i32) -> (i32, i32) {
    %c0_i32 = arith.constant 0 : i32
    %c0_i32_0 = arith.constant 0 : i32
    %c0_i32_1 = arith.constant 0 : i32
    return %c0_i32, %c0_i32_0 : i32, i32
  }
  func.func @transform_14(%arg0: i32) -> (i32, i32) {
    %c0_i32 = arith.constant 0 : i32
    %c0_i32_0 = arith.constant 0 : i32
    %c0_i32_1 = arith.constant 0 : i32
    return %c0_i32, %c0_i32_0 : i32, i32
  }
  func.func @transform_15(%arg0: i32) -> (i32, i32) {
    %c0_i32 = arith.constant 0 : i32
    %c0_i32_0 = arith.constant 0 : i32
    %c0_i32_1 = arith.constant 0 : i32
    return %c0_i32, %c0_i32_0 : i32, i32
  }
  func.func @transform_16(%arg0: i32) -> (i32, i32) {
    %c0_i32 = arith.constant 0 : i32
    %c0_i32_0 = arith.constant 0 : i32
    %c0_i32_1 = arith.constant 0 : i32
    return %c0_i32, %c0_i32_0 : i32, i32
  }
  func.func @transform_17(%arg0: i32) -> (i32, i32, i32) {
    %c0_i32 = arith.constant 0 : i32
    %c0_i32_0 = arith.constant 0 : i32
    %c0_i32_1 = arith.constant 0 : i32
    return %arg0, %c0_i32, %c0_i32_0 : i32, i32, i32
  }
  func.func @transform_18(%arg0: i32) -> (i32, i32, i32) {
    %c0_i32 = arith.constant 0 : i32
    %c0_i32_0 = arith.constant 0 : i32
    %c0_i32_1 = arith.constant 0 : i32
    return %arg0, %c0_i32, %c0_i32_0 : i32, i32, i32
  }
}

</mosaic_0001>

<llo_original>
// kernel: tpu_custom_call.1
$region0: #{tpu_custom_call.1}
  #allocation0 [shape = 'u32[]', space=smem, size = 0x4, offset = 0x4, fixed_abs, tag = 'smem constant byte address 0x4 - core index']
  #allocation1 [shape = 'u32[72,128]{1,0:T(1,128)}', space=vmem, size = 0x9000, scoped, tag = 'internal scratch']
  %s0 = inlined_call_operand.vmem [shape: f32[2,8,32], index: 0, kind: input, shape index: {}]
  %s1 = inlined_call_operand.vmem [shape: f32[1,32], index: 1, kind: input, shape index: {}]
  %s2 = inlined_call_operand.vmem [shape: f32[1,32], index: 2, kind: input, shape index: {}]
  %s3 = inlined_call_operand.vmem [shape: f32[1,8], index: 3, kind: input, shape index: {}]
  %s4 = inlined_call_operand.vmem [shape: f32[1,16], index: 4, kind: input, shape index: {}]
  %s5 = inlined_call_operand.vmem [shape: f32[1,16], index: 5, kind: input, shape index: {}]
  %s6 = inlined_call_operand.vmem [shape: bf16[32,128], index: 6, kind: input, shape index: {}]
  %s7 = inlined_call_operand.vmem [shape: f32[4,64], index: 7, kind: input, shape index: {}]
  %s8 = inlined_call_operand.vmem [shape: f32[1,64], index: 8, kind: input, shape index: {}]
  %s9 = inlined_call_operand.vmem [shape: bf16[64,40], index: 9, kind: input, shape index: {}]
  %s10 = inlined_call_operand.vmem [shape: bf16[8,64], index: 10, kind: input, shape index: {}]
  %s11 = inlined_call_operand.vmem [shape: f32[1,64], index: 11, kind: input, shape index: {}]
  %s12 = inlined_call_operand.vmem [shape: f32[16,64], index: 12, kind: input, shape index: {}]
  %s13 = inlined_call_operand.vmem [shape: f32[1,64], index: 13, kind: input, shape index: {}]
  %s14 = inlined_call_operand.vmem [shape: bf16[64,32], index: 14, kind: input, shape index: {}]
  %s15 = inlined_call_operand.vmem [shape: bf16[32,128], index: 15, kind: input, shape index: {}]
  %s16 = inlined_call_operand.vmem [shape: bf16[64,32], index: 16, kind: input, shape index: {}]
  %s17 = inlined_call_operand.hbm [shape: f32[2,8,32], index: 17, kind: output, shape index: {0}]
  %s18 = inlined_call_operand.hbm [shape: f32[2,8,32], index: 18, kind: output, shape index: {1}]
  %19 = xla_tuple %s17, %s18
  %s20 = sld [smem:[#allocation0]]
  $region109: #{tpu_custom_call.1} parent=0
    _
  %s22 = ssub.s32 1, %s20
  %s23 = scalar_select 0, %s22, %s20
  $region1: #{tpu_custom_call.1} parent=0
    #allocation2 [shape = 'u8[8192]{0}', space=vmem, size = 0x2000, scoped, tag = 'output window, operand 0']
    #allocation3 [shape = 's32[2]{0}', space=sflag, size = 0x8, scoped, tag = 'scoped memory for tpu_custom_call.1']
    #allocation4 [shape = 'u8[8192]{0}', space=vmem, size = 0x2000, scoped, tag = 'output window, operand 1']
    #allocation5 [shape = 's32[2]{0}', space=sflag, size = 0x8, scoped, tag = 'scoped memory for tpu_custom_call.1']
    %24 = vsyncpa [#allocation3], 0
    %s25 = scalar_lea.sflag [#allocation3], 1
    %26 = vsyncpa %s25, 0
    %27 = vsyncpa [#allocation5], 0
    %s28 = scalar_lea.sflag [#allocation5], 1
    %29 = vsyncpa %s28, 0
    loop: start=0, step=1, limit=4
    $region2: #{tpu_custom_call.1} parent=1 // loop_pre_header
      _
    $region3: #{tpu_custom_call.1} parent=1 // loop_header
      %s31 = sphi 0, %s35
      %p32 = scmp.ge.s32.totalorder %s31, 4
      %s41 = sphi 0, %s43
      %s44 = sphi 0, %s41
      %s45 = sphi 0, %s44
      %s61 = sphi 0, %s45
      %s65 = sphi 0, %s65
      %s67 = sphi 0, %s65
      %s68 = sphi 0, %s67
      %s82 = sphi 0, %s68
      %s86 = sphi 0, %s86
      %s88 = sphi 0, %s86
      %s89 = sphi 0, %s88
      %s103 = sphi 0, %s89
      %s107 = sphi 0, %s107
      %s109 = sphi 0, %s107
      %s110 = sphi 0, %s109
      %s124 = sphi 0, %s110
      %s128 = sphi 0, %s128
      %s130 = sphi 0, %s128
      %s131 = sphi 0, %s130
      %s145 = sphi 0, %s131
      %s149 = sphi 0, %s149
      %s151 = sphi 0, %s149
      %s152 = sphi 0, %s151
      %s166 = sphi 0, %s152
      %s170 = sphi 0, %s170
      %s172 = sphi 0, %s170
      %s173 = sphi 0, %s172
      %s187 = sphi 0, %s173
      %s191 = sphi 0, %s191
      %s193 = sphi 0, %s191
      %s194 = sphi 0, %s193
      %s208 = sphi 0, %s194
      %s212 = sphi 0, %s212
      %s214 = sphi 0, %s212
      %s215 = sphi 0, %s214
      %s229 = sphi 0, %s215
      %s233 = sphi 0, %s233
      %s235 = sphi 0, %s233
      %s236 = sphi 0, %s235
      %s250 = sphi 0, %s236
      %s254 = sphi 0, %s254
      %s256 = sphi 0, %s254
      %s257 = sphi 0, %s256
      %s271 = sphi 0, %s257
      %s275 = sphi 0, %s275
      %s277 = sphi 0, %s275
      %s278 = sphi 0, %s277
      %s292 = sphi 0, %s278
      %s296 = sphi 0, %s296
      %s298 = sphi 0, %s296
      %s299 = sphi 0, %s298
      %s313 = sphi 0, %s299
      %s317 = sphi 0, %s317
      %s319 = sphi 0, %s317
      %s320 = sphi 0, %s319
      %s334 = sphi 0, %s320
      %s338 = sphi 0, %s338
      %s340 = sphi 0, %s338
      %s341 = sphi 0, %s340
      %s355 = sphi 0, %s341
      %s359 = sphi 0, %s359
      %s361 = sphi 0, %s359
      %s362 = sphi 0, %s361
      %s376 = sphi 0, %s362
      %s380 = sphi 0, %s380
      %s382 = sphi 0, %s380
      %s383 = sphi 0, %s382
      %s397 = sphi 0, %s383
      %s403 = sphi 0, %s405
      %s406 = sphi 0, %s403
      %s407 = sphi 0, %s406
      %s423 = sphi 0, %s407
      %s429 = sphi 0, %s431
      %s432 = sphi 0, %s429
      %s433 = sphi 0, %s432
      %s449 = sphi 0, %s433
    $region4: #{tpu_custom_call.1} parent=1 // loop_header_branch
      %34 = sbr.rel (%p32) target = $region8
    $region5: #{tpu_custom_call.1} parent=1 // loop_body
      %s36 = ssub.s32 %s31, 1
      %s37 = ssub.s32 %s31, 2
      %s38 = sadd.s32 %s31, 1
      %s39 = ssub.s32 %s31, %s38
      %p40 = scmp.eq.s32.totalorder %s39, 0
      %s42 = sadd.s32 %s41, 1
      %s43 = scalar_select %p40, %s41, %s42
      %p46 = pneg %p40
      %p47 = scmp.eq.s32.totalorder %s31, 1
      %p48 = por %p46, %p47
      %p49 = scmp.ne.s32.totalorder %s41, %s44
      %p50 = scmp.eq.s32.totalorder %s31, 0
      %p51 = por %p49, %p50
      %p52 = scmp.ne.s32.totalorder %s41, %s44
      %p53 = scmp.eq.s32.totalorder %s36, 1
      %p54 = por %p52, %p53
      %p55 = scmp.ne.s32.totalorder %s44, %s45
      %p56 = scmp.eq.s32.totalorder %s36, 0
      %p57 = por %p55, %p56
      %p58 = scmp.ne.s32.totalorder %s44, %s45
      %p59 = scmp.eq.s32.totalorder %s37, 1
      %p60 = por %p58, %p59
      %p62 = scmp.ne.s32.totalorder %s45, %s61
      %p63 = scmp.eq.s32.totalorder %s37, 0
      %p64 = por %p62, %p63
      %s66 = sadd.s32 %s65, 1
      %p69 = scmp.eq.s32.totalorder %s31, 1
      %p70 = scmp.ne.s32.totalorder %s65, %s67
      %p71 = scmp.eq.s32.totalorder %s31, 0
      %p72 = por %p70, %p71
      %p73 = scmp.ne.s32.totalorder %s65, %s67
      %p74 = scmp.eq.s32.totalorder %s36, 1
      %p75 = por %p73, %p74
      %p76 = scmp.ne.s32.totalorder %s67, %s68
      %p77 = scmp.eq.s32.totalorder %s36, 0
      %p78 = por %p76, %p77
      %p79 = scmp.ne.s32.totalorder %s67, %s68
      %p80 = scmp.eq.s32.totalorder %s37, 1
      %p81 = por %p79, %p80
      %p83 = scmp.ne.s32.totalorder %s68, %s82
      %p84 = scmp.eq.s32.totalorder %s37, 0
      %p85 = por %p83, %p84
      %s87 = sadd.s32 %s86, 1
      %p90 = scmp.eq.s32.totalorder %s31, 1
      %p91 = scmp.ne.s32.totalorder %s86, %s88
      %p92 = scmp.eq.s32.totalorder %s31, 0
      %p93 = por %p91, %p92
      %p94 = scmp.ne.s32.totalorder %s86, %s88
      %p95 = scmp.eq.s32.totalorder %s36, 1
      %p96 = por %p94, %p95
      %p97 = scmp.ne.s32.totalorder %s88, %s89
      %p98 = scmp.eq.s32.totalorder %s36, 0
      %p99 = por %p97, %p98
      %p100 = scmp.ne.s32.totalorder %s88, %s89
      %p101 = scmp.eq.s32.totalorder %s37, 1
      %p102 = por %p100, %p101
      %p104 = scmp.ne.s32.totalorder %s89, %s103
      %p105 = scmp.eq.s32.totalorder %s37, 0
      %p106 = por %p104, %p105
      %s108 = sadd.s32 %s107, 1
      %p111 = scmp.eq.s32.totalorder %s31, 1
      %p112 = scmp.ne.s32.totalorder %s107, %s109
      %p113 = scmp.eq.s32.totalorder %s31, 0
      %p114 = por %p112, %p113
      %p115 = scmp.ne.s32.totalorder %s107, %s109
      %p116 = scmp.eq.s32.totalorder %s36, 1
      %p117 = por %p115, %p116
      %p118 = scmp.ne.s32.totalorder %s109, %s110
      %p119 = scmp.eq.s32.totalorder %s36, 0
      %p120 = por %p118, %p119
      %p121 = scmp.ne.s32.totalorder %s109, %s110
      %p122 = scmp.eq.s32.totalorder %s37, 1
      %p123 = por %p121, %p122
      %p125 = scmp.ne.s32.totalorder %s110, %s124
      %p126 = scmp.eq.s32.totalorder %s37, 0
      %p127 = por %p125, %p126
      %s129 = sadd.s32 %s128, 1
      %p132 = scmp.eq.s32.totalorder %s31, 1
      %p133 = scmp.ne.s32.totalorder %s128, %s130
      %p134 = scmp.eq.s32.totalorder %s31, 0
      %p135 = por %p133, %p134
      %p136 = scmp.ne.s32.totalorder %s128, %s130
      %p137 = scmp.eq.s32.totalorder %s36, 1
      %p138 = por %p136, %p137
      %p139 = scmp.ne.s32.totalorder %s130, %s131
      %p140 = scmp.eq.s32.totalorder %s36, 0
      %p141 = por %p139, %p140
      %p142 = scmp.ne.s32.totalorder %s130, %s131
      %p143 = scmp.eq.s32.totalorder %s37, 1
      %p144 = por %p142, %p143
      %p146 = scmp.ne.s32.totalorder %s131, %s145
      %p147 = scmp.eq.s32.totalorder %s37, 0
      %p148 = por %p146, %p147
      %s150 = sadd.s32 %s149, 1
      %p153 = scmp.eq.s32.totalorder %s31, 1
      %p154 = scmp.ne.s32.totalorder %s149, %s151
      %p155 = scmp.eq.s32.totalorder %s31, 0
      %p156 = por %p154, %p155
      %p157 = scmp.ne.s32.totalorder %s149, %s151
      %p158 = scmp.eq.s32.totalorder %s36, 1
      %p159 = por %p157, %p158
      %p160 = scmp.ne.s32.totalorder %s151, %s152
      %p161 = scmp.eq.s32.totalorder %s36, 0
      %p162 = por %p160, %p161
      %p163 = scmp.ne.s32.totalorder %s151, %s152
      %p164 = scmp.eq.s32.totalorder %s37, 1
      %p165 = por %p163, %p164
      %p167 = scmp.ne.s32.totalorder %s152, %s166
      %p168 = scmp.eq.s32.totalorder %s37, 0
      %p169 = por %p167, %p168
      %s171 = sadd.s32 %s170, 1
      %p174 = scmp.eq.s32.totalorder %s31, 1
      %p175 = scmp.ne.s32.totalorder %s170, %s172
      %p176 = scmp.eq.s32.totalorder %s31, 0
      %p177 = por %p175, %p176
      %p178 = scmp.ne.s32.totalorder %s170, %s172
      %p179 = scmp.eq.s32.totalorder %s36, 1
      %p180 = por %p178, %p179
      %p181 = scmp.ne.s32.totalorder %s172, %s173
      %p182 = scmp.eq.s32.totalorder %s36, 0
      %p183 = por %p181, %p182
      %p184 = scmp.ne.s32.totalorder %s172, %s173
      %p185 = scmp.eq.s32.totalorder %s37, 1
      %p186 = por %p184, %p185
      %p188 = scmp.ne.s32.totalorder %s173, %s187
      %p189 = scmp.eq.s32.totalorder %s37, 0
      %p190 = por %p188, %p189
      %s192 = sadd.s32 %s191, 1
      %p195 = scmp.eq.s32.totalorder %s31, 1
      %p196 = scmp.ne.s32.totalorder %s191, %s193
      %p197 = scmp.eq.s32.totalorder %s31, 0
      %p198 = por %p196, %p197
      %p199 = scmp.ne.s32.totalorder %s191, %s193
      %p200 = scmp.eq.s32.totalorder %s36, 1
      %p201 = por %p199, %p200
      %p202 = scmp.ne.s32.totalorder %s193, %s194
      %p203 = scmp.eq.s32.totalorder %s36, 0
      %p204 = por %p202, %p203
      %p205 = scmp.ne.s32.totalorder %s193, %s194
      %p206 = scmp.eq.s32.totalorder %s37, 1
      %p207 = por %p205, %p206
      %p209 = scmp.ne.s32.totalorder %s194, %s208
      %p210 = scmp.eq.s32.totalorder %s37, 0
      %p211 = por %p209, %p210
      %s213 = sadd.s32 %s212, 1
      %p216 = scmp.eq.s32.totalorder %s31, 1
      %p217 = scmp.ne.s32.totalorder %s212, %s214
      %p218 = scmp.eq.s32.totalorder %s31, 0
      %p219 = por %p217, %p218
      %p220 = scmp.ne.s32.totalorder %s212, %s214
      %p221 = scmp.eq.s32.totalorder %s36, 1
      %p222 = por %p220, %p221
      %p223 = scmp.ne.s32.totalorder %s214, %s215
      %p224 = scmp.eq.s32.totalorder %s36, 0
      %p225 = por %p223, %p224
      %p226 = scmp.ne.s32.totalorder %s214, %s215
      %p227 = scmp.eq.s32.totalorder %s37, 1
      %p228 = por %p226, %p227
      %p230 = scmp.ne.s32.totalorder %s215, %s229
      %p231 = scmp.eq.s32.totalorder %s37, 0
      %p232 = por %p230, %p231
      %s234 = sadd.s32 %s233, 1
      %p237 = scmp.eq.s32.totalorder %s31, 1
      %p238 = scmp.ne.s32.totalorder %s233, %s235
      %p239 = scmp.eq.s32.totalorder %s31, 0
      %p240 = por %p238, %p239
      %p241 = scmp.ne.s32.totalorder %s233, %s235
      %p242 = scmp.eq.s32.totalorder %s36, 1
      %p243 = por %p241, %p242
      %p244 = scmp.ne.s32.totalorder %s235, %s236
      %p245 = scmp.eq.s32.totalorder %s36, 0
      %p246 = por %p244, %p245
      %p247 = scmp.ne.s32.totalorder %s235, %s236
      %p248 = scmp.eq.s32.totalorder %s37, 1
      %p249 = por %p247, %p248
      %p251 = scmp.ne.s32.totalorder %s236, %s250
      %p252 = scmp.eq.s32.totalorder %s37, 0
      %p253 = por %p251, %p252
      %s255 = sadd.s32 %s254, 1
      %p258 = scmp.eq.s32.totalorder %s31, 1
      %p259 = scmp.ne.s32.totalorder %s254, %s256
      %p260 = scmp.eq.s32.totalorder %s31, 0
      %p261 = por %p259, %p260
      %p262 = scmp.ne.s32.totalorder %s254, %s256
      %p263 = scmp.eq.s32.totalorder %s36, 1
      %p264 = por %p262, %p263
      %p265 = scmp.ne.s32.totalorder %s256, %s257
      %p266 = scmp.eq.s32.totalorder %s36, 0
      %p267 = por %p265, %p266
      %p268 = scmp.ne.s32.totalorder %s256, %s257
      %p269 = scmp.eq.s32.totalorder %s37, 1
      %p270 = por %p268, %p269
      %p272 = scmp.ne.s32.totalorder %s257, %s271
      %p273 = scmp.eq.s32.totalorder %s37, 0
      %p274 = por %p272, %p273
      %s276 = sadd.s32 %s275, 1
      %p279 = scmp.eq.s32.totalorder %s31, 1
      %p280 = scmp.ne.s32.totalorder %s275, %s277
      %p281 = scmp.eq.s32.totalorder %s31, 0
      %p282 = por %p280, %p281
      %p283 = scmp.ne.s32.totalorder %s275, %s277
      %p284 = scmp.eq.s32.totalorder %s36, 1
      %p285 = por %p283, %p284
      %p286 = scmp.ne.s32.totalorder %s277, %s278
      %p287 = scmp.eq.s32.totalorder %s36, 0
      %p288 = por %p286, %p287
      %p289 = scmp.ne.s32.totalorder %s277, %s278
      %p290 = scmp.eq.s32.totalorder %s37, 1
      %p291 = por %p289, %p290
      %p293 = scmp.ne.s32.totalorder %s278, %s292
      %p294 = scmp.eq.s32.totalorder %s37, 0
      %p295 = por %p293, %p294
      %s297 = sadd.s32 %s296, 1
      %p300 = scmp.eq.s32.totalorder %s31, 1
      %p301 = scmp.ne.s32.totalorder %s296, %s298
      %p302 = scmp.eq.s32.totalorder %s31, 0
      %p303 = por %p301, %p302
      %p304 = scmp.ne.s32.totalorder %s296, %s298
      %p305 = scmp.eq.s32.totalorder %s36, 1
      %p306 = por %p304, %p305
      %p307 = scmp.ne.s32.totalorder %s298, %s299
      %p308 = scmp.eq.s32.totalorder %s36, 0
      %p309 = por %p307, %p308
      %p310 = scmp.ne.s32.totalorder %s298, %s299
      %p311 = scmp.eq.s32.totalorder %s37, 1
      %p312 = por %p310, %p311
      %p314 = scmp.ne.s32.totalorder %s299, %s313
      %p315 = scmp.eq.s32.totalorder %s37, 0
      %p316 = por %p314, %p315
      %s318 = sadd.s32 %s317, 1
      %p321 = scmp.eq.s32.totalorder %s31, 1
      %p322 = scmp.ne.s32.totalorder %s317, %s319
      %p323 = scmp.eq.s32.totalorder %s31, 0
      %p324 = por %p322, %p323
      %p325 = scmp.ne.s32.totalorder %s317, %s319
      %p326 = scmp.eq.s32.totalorder %s36, 1
      %p327 = por %p325, %p326
      %p328 = scmp.ne.s32.totalorder %s319, %s320
      %p329 = scmp.eq.s32.totalorder %s36, 0
      %p330 = por %p328, %p329
      %p331 = scmp.ne.s32.totalorder %s319, %s320
      %p332 = scmp.eq.s32.totalorder %s37, 1
      %p333 = por %p331, %p332
      %p335 = scmp.ne.s32.totalorder %s320, %s334
      %p336 = scmp.eq.s32.totalorder %s37, 0
      %p337 = por %p335, %p336
      %s339 = sadd.s32 %s338, 1
      %p342 = scmp.eq.s32.totalorder %s31, 1
      %p343 = scmp.ne.s32.totalorder %s338, %s340
      %p344 = scmp.eq.s32.totalorder %s31, 0
      %p345 = por %p343, %p344
      %p346 = scmp.ne.s32.totalorder %s338, %s340
      %p347 = scmp.eq.s32.totalorder %s36, 1
      %p348 = por %p346, %p347
      %p349 = scmp.ne.s32.totalorder %s340, %s341
      %p350 = scmp.eq.s32.totalorder %s36, 0
      %p351 = por %p349, %p350
      %p352 = scmp.ne.s32.totalorder %s340, %s341
      %p353 = scmp.eq.s32.totalorder %s37, 1
      %p354 = por %p352, %p353
      %p356 = scmp.ne.s32.totalorder %s341, %s355
      %p357 = scmp.eq.s32.totalorder %s37, 0
      %p358 = por %p356, %p357
      %s360 = sadd.s32 %s359, 1
      %p363 = scmp.eq.s32.totalorder %s31, 1
      %p364 = scmp.ne.s32.totalorder %s359, %s361
      %p365 = scmp.eq.s32.totalorder %s31, 0
      %p366 = por %p364, %p365
      %p367 = scmp.ne.s32.totalorder %s359, %s361
      %p368 = scmp.eq.s32.totalorder %s36, 1
      %p369 = por %p367, %p368
      %p370 = scmp.ne.s32.totalorder %s361, %s362
      %p371 = scmp.eq.s32.totalorder %s36, 0
      %p372 = por %p370, %p371
      %p373 = scmp.ne.s32.totalorder %s361, %s362
      %p374 = scmp.eq.s32.totalorder %s37, 1
      %p375 = por %p373, %p374
      %p377 = scmp.ne.s32.totalorder %s362, %s376
      %p378 = scmp.eq.s32.totalorder %s37, 0
      %p379 = por %p377, %p378
      %s381 = sadd.s32 %s380, 1
      %p384 = scmp.eq.s32.totalorder %s31, 1
      %p385 = scmp.ne.s32.totalorder %s380, %s382
      %p386 = scmp.eq.s32.totalorder %s31, 0
      %p387 = por %p385, %p386
      %p388 = scmp.ne.s32.totalorder %s380, %s382
      %p389 = scmp.eq.s32.totalorder %s36, 1
      %p390 = por %p388, %p389
      %p391 = scmp.ne.s32.totalorder %s382, %s383
      %p392 = scmp.eq.s32.totalorder %s36, 0
      %p393 = por %p391, %p392
      %p394 = scmp.ne.s32.totalorder %s382, %s383
      %p395 = scmp.eq.s32.totalorder %s37, 1
      %p396 = por %p394, %p395
      %p398 = scmp.ne.s32.totalorder %s383, %s397
      %p399 = scmp.eq.s32.totalorder %s37, 0
      %p400 = por %p398, %p399
      %s401 = ssub.s32 %s31, %s38
      %p402 = scmp.eq.s32.totalorder %s401, 0
      %s404 = sadd.s32 %s403, 1
      %s405 = scalar_select %p402, %s403, %s404
      %p408 = pneg %p402
      %p409 = scmp.eq.s32.totalorder %s31, 1
      %p410 = por %p408, %p409
      %p411 = scmp.ne.s32.totalorder %s403, %s406
      %p412 = scmp.eq.s32.totalorder %s31, 0
      %p413 = por %p411, %p412
      %p414 = scmp.ne.s32.totalorder %s403, %s406
      %p415 = scmp.eq.s32.totalorder %s36, 1
      %p416 = por %p414, %p415
      %p417 = scmp.ne.s32.totalorder %s406, %s407
      %p418 = scmp.eq.s32.totalorder %s36, 0
      %p419 = por %p417, %p418
      %p420 = scmp.ne.s32.totalorder %s406, %s407
      %p421 = scmp.eq.s32.totalorder %s37, 1
      %p422 = por %p420, %p421
      %p424 = scmp.ne.s32.totalorder %s407, %s423
      %p425 = scmp.eq.s32.totalorder %s37, 0
      %p426 = por %p424, %p425
      %s427 = ssub.s32 %s31, %s38
      %p428 = scmp.eq.s32.totalorder %s427, 0
      %s430 = sadd.s32 %s429, 1
      %s431 = scalar_select %p428, %s429, %s430
      %p434 = pneg %p428
      %p435 = scmp.eq.s32.totalorder %s31, 1
      %p436 = por %p434, %p435
      %p437 = scmp.ne.s32.totalorder %s429, %s432
      %p438 = scmp.eq.s32.totalorder %s31, 0
      %p439 = por %p437, %p438
      %p440 = scmp.ne.s32.totalorder %s429, %s432
      %p441 = scmp.eq.s32.totalorder %s36, 1
      %p442 = por %p440, %p441
      %p443 = scmp.ne.s32.totalorder %s432, %s433
      %p444 = scmp.eq.s32.totalorder %s36, 0
      %p445 = por %p443, %p444
      %p446 = scmp.ne.s32.totalorder %s432, %s433
      %p447 = scmp.eq.s32.totalorder %s37, 1
      %p448 = por %p446, %p447
      %p450 = scmp.ne.s32.totalorder %s433, %s449
      %p451 = scmp.eq.s32.totalorder %s37, 0
      %p452 = por %p450, %p451
      %p453 = scmp.le.s32.totalorder 1, %s31
      %p454 = scmp.lt.s32.totalorder %s31, 3
      %p455 = pnand %p453, %p454
      %p456 = pneg %p455
      // Predicated region
      $region9: #{tpu_custom_call.1} parent=5 // pred_check
        _
      $region10: #{tpu_custom_call.1} parent=5 // pred_check_branch
        %458 = sbr.rel (%p455) target = $region12
      $region11: #{tpu_custom_call.1} parent=5 // pred_region
        %s459 = ssub.s32 %s31, 1
        // Predicated region
        $region13: #{tpu_custom_call.1} parent=11 // pred_check
          %p460 = pneg %p78
        $region14: #{tpu_custom_call.1} parent=11 // pred_check_branch
          %462 = sbr.rel (%p460) target = $region16
        $region15: #{tpu_custom_call.1} parent=11 // pred_region
          _
        $region16: #{tpu_custom_call.1} parent=11 // pred_fallthru
          _
        // Predicated region
        $region17: #{tpu_custom_call.1} parent=11 // pred_check
          %p463 = pneg %p99
        $region18: #{tpu_custom_call.1} parent=11 // pred_check_branch
          %465 = sbr.rel (%p463) target = $region20
        $region19: #{tpu_custom_call.1} parent=11 // pred_region
          _
        $region20: #{tpu_custom_call.1} parent=11 // pred_fallthru
          _
        // Predicated region
        $region21: #{tpu_custom_call.1} parent=11 // pred_check
          %p466 = pneg %p120
        $region22: #{tpu_custom_call.1} parent=11 // pred_check_branch
          %468 = sbr.rel (%p466) target = $region24
        $region23: #{tpu_custom_call.1} parent=11 // pred_region
          _
        $region24: #{tpu_custom_call.1} parent=11 // pred_fallthru
          _
        // Predicated region
        $region25: #{tpu_custom_call.1} parent=11 // pred_check
          %p469 = pneg %p141
        $region26: #{tpu_custom_call.1} parent=11 // pred_check_branch
          %471 = sbr.rel (%p469) target = $region28
        $region27: #{tpu_custom_call.1} parent=11 // pred_region
          _
        $region28: #{tpu_custom_call.1} parent=11 // pred_fallthru
          _
        // Predicated region
        $region29: #{tpu_custom_call.1} parent=11 // pred_check
          %p472 = pneg %p162
        $region30: #{tpu_custom_call.1} parent=11 // pred_check_branch
          %474 = sbr.rel (%p472) target = $region32
        $region31: #{tpu_custom_call.1} parent=11 // pred_region
          _
        $region32: #{tpu_custom_call.1} parent=11 // pred_fallthru
          _
        // Predicated region
        $region33: #{tpu_custom_call.1} parent=11 // pred_check
          %p475 = pneg %p183
        $region34: #{tpu_custom_call.1} parent=11 // pred_check_branch
          %477 = sbr.rel (%p475) target = $region36
        $region35: #{tpu_custom_call.1} parent=11 // pred_region
          _
        $region36: #{tpu_custom_call.1} parent=11 // pred_fallthru
          _
        // Predicated region
        $region37: #{tpu_custom_call.1} parent=11 // pred_check
          %p478 = pneg %p204
        $region38: #{tpu_custom_call.1} parent=11 // pred_check_branch
          %480 = sbr.rel (%p478) target = $region40
        $region39: #{tpu_custom_call.1} parent=11 // pred_region
          _
        $region40: #{tpu_custom_call.1} parent=11 // pred_fallthru
          _
        // Predicated region
        $region41: #{tpu_custom_call.1} parent=11 // pred_check
          %p481 = pneg %p225
        $region42: #{tpu_custom_call.1} parent=11 // pred_check_branch
          %483 = sbr.rel (%p481) target = $region44
        $region43: #{tpu_custom_call.1} parent=11 // pred_region
          _
        $region44: #{tpu_custom_call.1} parent=11 // pred_fallthru
          _
        // Predicated region
        $region45: #{tpu_custom_call.1} parent=11 // pred_check
          %p484 = pneg %p246
        $region46: #{tpu_custom_call.1} parent=11 // pred_check_branch
          %486 = sbr.rel (%p484) target = $region48
        $region47: #{tpu_custom_call.1} parent=11 // pred_region
          _
        $region48: #{tpu_custom_call.1} parent=11 // pred_fallthru
          _
        // Predicated region
        $region49: #{tpu_custom_call.1} parent=11 // pred_check
          %p487 = pneg %p267
        $region50: #{tpu_custom_call.1} parent=11 // pred_check_branch
          %489 = sbr.rel (%p487) target = $region52
        $region51: #{tpu_custom_call.1} parent=11 // pred_region
          _
        $region52: #{tpu_custom_call.1} parent=11 // pred_fallthru
          _
        // Predicated region
        $region53: #{tpu_custom_call.1} parent=11 // pred_check
          %p490 = pneg %p288
        $region54: #{tpu_custom_call.1} parent=11 // pred_check_branch
          %492 = sbr.rel (%p490) target = $region56
        $region55: #{tpu_custom_call.1} parent=11 // pred_region
          _
        $region56: #{tpu_custom_call.1} parent=11 // pred_fallthru
          _
        // Predicated region
        $region57: #{tpu_custom_call.1} parent=11 // pred_check
          %p493 = pneg %p309
        $region58: #{tpu_custom_call.1} parent=11 // pred_check_branch
          %495 = sbr.rel (%p493) target = $region60
        $region59: #{tpu_custom_call.1} parent=11 // pred_region
          _
        $region60: #{tpu_custom_call.1} parent=11 // pred_fallthru
          _
        // Predicated region
        $region61: #{tpu_custom_call.1} parent=11 // pred_check
          %p496 = pneg %p330
        $region62: #{tpu_custom_call.1} parent=11 // pred_check_branch
          %498 = sbr.rel (%p496) target = $region64
        $region63: #{tpu_custom_call.1} parent=11 // pred_region
          _
        $region64: #{tpu_custom_call.1} parent=11 // pred_fallthru
          _
        // Predicated region
        $region65: #{tpu_custom_call.1} parent=11 // pred_check
          %p499 = pneg %p351
        $region66: #{tpu_custom_call.1} parent=11 // pred_check_branch
          %501 = sbr.rel (%p499) target = $region68
        $region67: #{tpu_custom_call.1} parent=11 // pred_region
          _
        $region68: #{tpu_custom_call.1} parent=11 // pred_fallthru
          _
        // Predicated region
        $region69: #{tpu_custom_call.1} parent=11 // pred_check
          %p502 = pneg %p372
        $region70: #{tpu_custom_call.1} parent=11 // pred_check_branch
          %504 = sbr.rel (%p502) target = $region72
        $region71: #{tpu_custom_call.1} parent=11 // pred_region
          _
        $region72: #{tpu_custom_call.1} parent=11 // pred_fallthru
          _
        // Predicated region
        $region73: #{tpu_custom_call.1} parent=11 // pred_check
          %p505 = pneg %p393
        $region74: #{tpu_custom_call.1} parent=11 // pred_check_branch
          %507 = sbr.rel (%p505) target = $region76
        $region75: #{tpu_custom_call.1} parent=11 // pred_region
          _
        $region76: #{tpu_custom_call.1} parent=11 // pred_fallthru
          _
      $region12: #{tpu_custom_call.1} parent=5 // pred_fallthru
        _
      %p508 = scmp.lt.s32.totalorder %s31, 2
      // Predicated region
      $region77: #{tpu_custom_call.1} parent=5 // pred_check
        %p509 = pneg %p508
      $region78: #{tpu_custom_call.1} parent=5 // pred_check_branch
        %511 = sbr.rel (%p509) target = $region80
      $region79: #{tpu_custom_call.1} parent=5 // pred_region
        // Predicated region
        $region81: #{tpu_custom_call.1} parent=79 // pred_check
          %p512 = pneg %p51
        $region82: #{tpu_custom_call.1} parent=79 // pred_check_branch
          %514 = sbr.rel (%p512) target = $region84
        $region83: #{tpu_custom_call.1} parent=79 // pred_region
          %p515 = scmp.lt.s32.totalorder %s31, 1
          %s516 = scalar_select %p515, %s31, 1
          %s517 = smul.addr %s516, 8
          %s518 = scalar_lea.vmem %s0, %s517
        $region84: #{tpu_custom_call.1} parent=79 // pred_fallthru
          _
      $region80: #{tpu_custom_call.1} parent=5 // pred_fallthru
        _
      %p519 = scmp.le.s32.totalorder 1, %s31
      %p520 = scmp.lt.s32.totalorder %s31, 3
      %p521 = pnand %p519, %p520
      %p522 = pneg %p521
      // Predicated region
      $region85: #{tpu_custom_call.1} parent=5 // pred_check
        _
      $region86: #{tpu_custom_call.1} parent=5 // pred_check_branch
        %524 = sbr.rel (%p521) target = $region88
      $region87: #{tpu_custom_call.1} parent=5 // pred_region
        %s525 = ssub.s32 %s31, 1
        %p526 = scmp.lt.s32.totalorder %s36, 1
        %s527 = scalar_select %p526, %s36, 1
        %s528 = smul.addr %s527, 8
        %s529 = scalar_lea.vmem %s0, %s528
        %p530 = pneg %p57
        %p531 = pneg %p54
        %p532 = pneg %p78
        %p533 = pneg %p75
        %p534 = pneg %p99
        %p535 = pneg %p96
        %p536 = pneg %p120
        %p537 = pneg %p117
        %p538 = pneg %p141
        %p539 = pneg %p138
        %p540 = pneg %p162
        %p541 = pneg %p159
        %p542 = pneg %p183
        %p543 = pneg %p180
        %p544 = pneg %p204
        %p545 = pneg %p201
        %p546 = pneg %p225
        %p547 = pneg %p222
        %p548 = pneg %p246
        %p549 = pneg %p243
        %p550 = pneg %p267
        %p551 = pneg %p264
        %p552 = pneg %p288
        %p553 = pneg %p285
        %p554 = pneg %p309
        %p555 = pneg %p306
        %p556 = pneg %p330
        %p557 = pneg %p327
        %p558 = pneg %p351
        %p559 = pneg %p348
        %p560 = pneg %p372
        %p561 = pneg %p369
        %p562 = pneg %p393
        %p563 = pneg %p390
        %p564 = pneg %p419
        %p565 = pneg %p416
        %s566 = sand.u32 %s406, 1
        %s567 = scalar_lea.sflag [#allocation3], %s566
        %s568 = sand.u32 %s406, 1
        %s569 = smul.addr %s568, 8
        %s570 = scalar_lea.vmem [#allocation2], %s569
        %p571 = pneg %p445
        %p572 = pneg %p442
        %s573 = sand.u32 %s432, 1
        %s574 = scalar_lea.sflag [#allocation5], %s573
        %s575 = sand.u32 %s432, 1
        %s576 = smul.addr %s575, 8
        %s577 = scalar_lea.vmem [#allocation4], %s576
        %p578 = scmp.lt.s32.totalorder %s36, 1
        %s579 = scalar_select %p578, %s36, 1
        %s580 = smul.addr %s579, 8
        %s581 = scalar_lea.vmem %s0, %s580
        %v583 = vld [vmem:[%s581] sm:$0xff]
        %v584 = vld [vmem:[%s1] sm:$0x1]
        %v585 = vmul.f32 %v583, %v583
        %vm586 = vcmask 261120
        %v587 = vsel %vm586, %v585, 0.0
        %588 = vadd.xlane.f32.xlu0 %v587
        %v589 = vpop.xlane.xlu0 %588
        %v590 = vrcp.pop 32.0
        %v591 = vmul.f32 32.0, %v590
        %v592 = vsub.f32 1.0, %v591
        %v593 = vmul.f32 %v590, %v592
        %v594 = vadd.f32 %v590, %v593
        %vm595 = vweird.f32 %v590
        %v596 = vsel %vm595, %v590, %v594
        %v597 = vmul.f32 %v589, %v596
        %v598 = vadd.f32 %v597, 1e-06
        %v599 = vrsqrt.pop %v598
        %v600 = vmul.f32 %v599, %v598
        %v601 = vmul.f32 %v600, %v599
        %v602 = vmul.f32 0.5, %v601
        %v603 = vsub.f32 1.5, %v602
        %v604 = vmul.f32 %v599, %v603
        %vm605 = vweird.f32 %v598
        %vm606 = vweird.f32 %v599
        %vm607 = vmor %vm605, %vm606
        %v608 = vsel %vm607, %v599, %v604
        %v609 = vmul.f32 %v583, %v608
        %v611 = vperm.slane %v584, 0
        %v613 = vmul.f32 %v609, %v611
        %v614 = vld [vmem:[%s6] sm:$0xf]
        %v615 = vld [vmem:[%s6 + $0x4] sm:$0xf]
        %v616 = vld [vmem:[%s6 + $0x8] sm:$0xf]
        %v617 = vld [vmem:[%s6 + $0xc] sm:$0xf]
        %v618 = vpack.c.bf16 %v613, %v613
        %v623 = vunpack.c.l.b16 %v614
        %v624 = vunpack.c.l.b16 %v615
        %v625 = vunpack.c.l.b16 %v616
        %v626 = vunpack.c.l.b16 %v617
        %v627 = vpack.c.b16 %v624, %v623
        %v628 = vpack.c.b16 %v626, %v625
        %v632 = vsel %vm586, %v618, 0
        %634 = vmatpush.bf16.msra.mxu0 0
        %635 = vmatpush.bf16.msra.mxu0 0
        %636 = vmatpush.bf16.msra.mxu0 0
        %637 = vmatpush.bf16.msra.mxu0 0
        %638 = vmatpush.bf16.msra.mxu0 0
        %639 = vmatpush.bf16.msra.mxu0 0
        %640 = vmatpush.bf16.msra.mxu0 %v628
        %641 = vmatpush.bf16.msra.mxu0 %v627
        %642 = vmatmul.bf16.gmra.mxu0 %v632
        %v643 = vpop.f32.mrf.mxu0
        %v644 = vadd.f32 0.0, %v643
        %v645 = vpop.f32.mrf.mxu0
        %646 = vdwg.mxu0
        %v647 = vld [vmem:[%s7] sm:$0xf]
        %v648 = vlaneseq
        %v649 = vshrl.u32 %v648, 7
        %v650 = vperm.slane %v647, 3
        %v651 = vmul.f32 %v644, %v650
        %v652 = vrot.slane %v644, 5
        %vm653 = vcmp.ge.s32.totalorder %v649, 3
        %v654 = vsel %vm653, %v652, 0.0
        %v655 = vperm.slane %v647, 0
        %v656 = vmul.f32 %v654, %v655
        %v657 = vadd.f32 %v651, %v656
        %v658 = vrot.slane %v644, 6
        %vm659 = vcmp.ge.s32.totalorder %v649, 2
        %v660 = vsel %vm659, %v658, 0.0
        %v661 = vperm.slane %v647, 1
        %v662 = vmul.f32 %v660, %v661
        %v663 = vadd.f32 %v657, %v662
        %v664 = vrot.slane %v644, 7
        %vm665 = vcmp.ge.s32.totalorder %v649, 1
        %v666 = vsel %vm665, %v664, 0.0
        %v667 = vperm.slane %v647, 2
        %v668 = vmul.f32 %v666, %v667
        %v669 = vadd.f32 %v663, %v668
        %v670 = vld [vmem:[%s8] sm:$0x1]
        %v672 = vperm.slane %v670, 0
        %v674 = vadd.f32 %v669, %v672
        %v675 = vxor.u32 %v674, 2147483648
        %v676 = vmul.f32 %v675, 1.442695
        %v677 = vpow.pop %v676
        %v678 = vadd.f32 %v677, 1.0
        %v679 = vrcp.pop %v678
        %v680 = vmul.f32 %v678, %v679
        %v681 = vsub.f32 1.0, %v680
        %v682 = vmul.f32 %v679, %v681
        %v683 = vadd.f32 %v679, %v682
        %vm684 = vweird.f32 %v678
        %vm685 = vweird.f32 %v679
        %vm686 = vmor %vm684, %vm685
        %v687 = vsel %vm686, %v679, %v683
        %v688 = vand.u32 2147483647, %v678
        %vm689 = vcmp.eq.f32.partialorder %v688, 8.507059e+37
        %v690 = vand.u32 %v678, 2147483648
        %v691 = vor.u32 1.1754944e-38, %v690
        %v692 = vsel %vm689, %v691, %v687
        %v693 = vmul.f32 1.0, %v692
        %v694 = vmul.f32 %v674, %v693
        %v695 = vld [vmem:[%s9] sm:$0xf]
        %v696 = vld [vmem:[%s9 + $0x4] sm:$0xf]
        %v697 = vld [vmem:[%s9 + $0x8] sm:$0xf]
        %v698 = vld [vmem:[%s9 + $0xc] sm:$0xf]
        %v699 = vld [vmem:[%s9 + $0x10] sm:$0xf]
        %v700 = vld [vmem:[%s9 + $0x14] sm:$0xf]
        %v701 = vld [vmem:[%s9 + $0x18] sm:$0xf]
        %v702 = vld [vmem:[%s9 + $0x1c] sm:$0xf]
        %v703 = vpack.c.bf16 %v694, %v694
        %v712 = vunpack.c.l.b16 %v695
        %v713 = vunpack.c.l.b16 %v696
        %v714 = vunpack.c.l.b16 %v697
        %v715 = vunpack.c.l.b16 %v698
        %v716 = vunpack.c.l.b16 %v699
        %v717 = vunpack.c.l.b16 %v700
        %v718 = vunpack.c.l.b16 %v701
        %v719 = vunpack.c.l.b16 %v702
        %v720 = vpack.c.b16 %v713, %v712
        %v721 = vpack.c.b16 %v715, %v714
        %v722 = vpack.c.b16 %v717, %v716
        %v723 = vpack.c.b16 %v719, %v718
        %vm728 = vcmask 523264
        %v730 = vsel %vm728, %v703, 0
        %732 = vmatpush.bf16.msra.mxu0 0
        %733 = vmatpush.bf16.msra.mxu0 0
        %734 = vmatpush.bf16.msra.mxu0 0
        %735 = vmatpush.bf16.msra.mxu0 0
        %736 = vmatpush.bf16.msra.mxu0 %v723
        %737 = vmatpush.bf16.msra.mxu0 %v722
        %738 = vmatpush.bf16.msra.mxu0 %v721
        %739 = vmatpush.bf16.msra.mxu0 %v720
        %740 = vmatmul.bf16.gmra.mxu0 %v730
        %v741 = vpop.f32.mrf.mxu0
        %v742 = vadd.f32 0.0, %v741
        %v743 = vpop.f32.mrf.mxu0
        %744 = vdwg.mxu0
        %v745 = vld [vmem:[%s3] sm:$0x1]
        %v746 = vmul.f32 %v742, %v742
        %vm747 = vcmask 64512
        %v748 = vsel %vm747, %v746, 0.0
        %749 = vadd.xlane.f32.xlu0 %v748
        %v750 = vpop.xlane.xlu0 %749
        %v751 = vrcp.pop 8.0
        %v752 = vmul.f32 8.0, %v751
        %v753 = vsub.f32 1.0, %v752
        %v754 = vmul.f32 %v751, %v753
        %v755 = vadd.f32 %v751, %v754
        %vm756 = vweird.f32 %v751
        %v757 = vsel %vm756, %v751, %v755
        %v758 = vmul.f32 %v750, %v757
        %v759 = vadd.f32 %v758, 1e-06
        %v760 = vrsqrt.pop %v759
        %v761 = vmul.f32 %v760, %v759
        %v762 = vmul.f32 %v761, %v760
        %v763 = vmul.f32 0.5, %v762
        %v764 = vsub.f32 1.5, %v763
        %v765 = vmul.f32 %v760, %v764
        %vm766 = vweird.f32 %v759
        %vm767 = vweird.f32 %v760
        %vm768 = vmor %vm766, %vm767
        %v769 = vsel %vm768, %v760, %v765
        %v770 = vmul.f32 %v742, %v769
        %v772 = vperm.slane %v745, 0
        %v774 = vmul.f32 %v770, %v772
        %v775 = vld [vmem:[%s4] sm:$0x1]
        %777 = vrot.lane.b32.xlu0 %v746, 120
        %v778 = vpop.permute.xlu0 %777
        %vm780 = vcmask 130048
        %v781 = vsel %vm780, %v778, 0.0
        %782 = vadd.xlane.f32.xlu0 %v781
        %v783 = vpop.xlane.xlu0 %782
        %v784 = vrcp.pop 16.0
        %v785 = vmul.f32 16.0, %v784
        %v786 = vsub.f32 1.0, %v785
        %v787 = vmul.f32 %v784, %v786
        %v788 = vadd.f32 %v784, %v787
        %vm789 = vweird.f32 %v784
        %v790 = vsel %vm789, %v784, %v788
        %v791 = vmul.f32 %v783, %v790
        %v792 = vadd.f32 %v791, 1e-06
        %v793 = vrsqrt.pop %v792
        %v794 = vmul.f32 %v793, %v792
        %v795 = vmul.f32 %v794, %v793
        %v796 = vmul.f32 0.5, %v795
        %v797 = vsub.f32 1.5, %v796
        %v798 = vmul.f32 %v793, %v797
        %vm799 = vweird.f32 %v792
        %vm800 = vweird.f32 %v793
        %vm801 = vmor %vm799, %vm800
        %v802 = vsel %vm801, %v793, %v798
        %v803 = vmul.f32 %v742, %v802
        %v805 = vperm.slane %v775, 0
        %806 = vrot.lane.b32.xlu0 %v805, 8
        %v807 = vpop.permute.xlu0 %806
        %v809 = vmul.f32 %v803, %v807
        %v810 = vld [vmem:[%s5] sm:$0x1]
        %811 = vrot.lane.b32.xlu0 %v746, 104
        %v812 = vpop.permute.xlu0 %811
        %v814 = vsel %vm780, %v812, 0.0
        %815 = vadd.xlane.f32.xlu0 %v814
        %v816 = vpop.xlane.xlu0 %815
        %v817 = vmul.f32 %v816, %v790
        %v818 = vadd.f32 %v817, 1e-06
        %v819 = vrsqrt.pop %v818
        %v820 = vmul.f32 %v819, %v818
        %v821 = vmul.f32 %v820, %v819
        %v822 = vmul.f32 0.5, %v821
        %v823 = vsub.f32 1.5, %v822
        %v824 = vmul.f32 %v819, %v823
        %vm825 = vweird.f32 %v818
        %vm826 = vweird.f32 %v819
        %vm827 = vmor %vm825, %vm826
        %v828 = vsel %vm827, %v819, %v824
        %v829 = vmul.f32 %v742, %v828
        %v831 = vperm.slane %v810, 0
        %832 = vrot.lane.b32.xlu0 %v831, 24
        %v833 = vpop.permute.xlu0 %832
        %v835 = vmul.f32 %v829, %v833
        %v836 = vld [vmem:[%s10] sm:$0xf]
        %v837 = vpack.c.bf16 %v774, %v774
        %v838 = vld [vmem:[%s11] sm:$0x1]
        %v840 = vperm.slane %v838, 0
        %v843 = vsel %vm747, %v837, 0
        %vm845 = vcmask 1043456
        %v847 = vsel %vm845, %v836, 0
        %849 = vmatpush.bf16.msra.mxu0 0
        %850 = vmatpush.bf16.msra.mxu0 0
        %851 = vmatpush.bf16.msra.mxu0 0
        %852 = vmatpush.bf16.msra.mxu0 0
        %853 = vmatpush.bf16.msra.mxu0 0
        %854 = vmatpush.bf16.msra.mxu0 0
        %855 = vmatpush.bf16.msra.mxu0 0
        %856 = vmatpush.bf16.msra.mxu0 %v847
        %857 = vmatmul.bf16.gmra.mxu0 %v843
        %v858 = vpop.f32.mrf.mxu0
        %v859 = vadd.f32 %v840, %v858
        %v860 = vpop.f32.mrf.mxu0
        %861 = vdwg.mxu0
        %v862 = vmax.f32 %v859, 0.0
        %v863 = vand.u32 2147483647, %v859
        %v864 = vsub.f32 0.0, %v863
        %v865 = vmul.f32 %v864, 1.442695
        %v866 = vpow.pop %v865
        %v867 = vadd.f32 %v866, 1.0
        %v868 = vlog2.pop %v867
        %v869 = vmul.f32 %v868, 0.6931472
        %v870 = vmul.f32 -0.5, %v866
        %v871 = vadd.f32 %v870, 1.0
        %v872 = vmul.f32 %v871, %v866
        %v873 = vand.u32 2147483647, %v866
        %vm874 = vcmp.lt.f32.partialorder %v873, 0.0004427343
        %v875 = vsel %vm874, %v872, %v869
        %v876 = vadd.f32 %v862, %v875
        %v877 = vmul.f32 %v876, %v694
        %v878 = vld [vmem:[%s12] sm:$0xff]
        %v879 = vld [vmem:[%s12 + $0x8] sm:$0xff]
        %v881 = vrot.slane %v876, 1
        %v882 = vrot.slane %v876, 2
        %v883 = vrot.slane %v876, 3
        %v884 = vrot.slane %v876, 4
        %v885 = vrot.slane %v876, 5
        %v886 = vrot.slane %v876, 6
        %v887 = vrot.slane %v876, 7
        %v888 = vperm.slane %v876, 0
        %v889 = vperm.slane %v881, 0
        %v890 = vperm.slane %v882, 0
        %v891 = vperm.slane %v883, 0
        %v892 = vperm.slane %v884, 0
        %v893 = vperm.slane %v885, 0
        %v894 = vperm.slane %v886, 0
        %v895 = vperm.slane %v887, 0
        %v904 = vmul.f32 %v888, %v878
        %v905 = vmul.f32 %v888, %v879
        %v906 = vmul.f32 %v889, %v878
        %v907 = vmul.f32 %v889, %v879
        %v908 = vmul.f32 %v890, %v878
        %v909 = vmul.f32 %v890, %v879
        %v910 = vmul.f32 %v891, %v878
        %v911 = vmul.f32 %v891, %v879
        %v912 = vmul.f32 %v892, %v878
        %v913 = vmul.f32 %v892, %v879
        %v914 = vmul.f32 %v893, %v878
        %v915 = vmul.f32 %v893, %v879
        %v916 = vmul.f32 %v894, %v878
        %v917 = vmul.f32 %v894, %v879
        %v918 = vmul.f32 %v895, %v878
        %v919 = vmul.f32 %v895, %v879
        %v920 = vmul.f32 %v904, 1.442695
        %v921 = vpow.pop %v920
        %v922 = vmul.f32 %v905, 1.442695
        %v923 = vpow.pop %v922
        %v924 = vmul.f32 %v906, 1.442695
        %v925 = vpow.pop %v924
        %v926 = vmul.f32 %v907, 1.442695
        %v927 = vpow.pop %v926
        %v928 = vmul.f32 %v908, 1.442695
        %v929 = vpow.pop %v928
        %v930 = vmul.f32 %v909, 1.442695
        %v931 = vpow.pop %v930
        %v932 = vmul.f32 %v910, 1.442695
        %v933 = vpow.pop %v932
        %v934 = vmul.f32 %v911, 1.442695
        %v935 = vpow.pop %v934
        %v936 = vmul.f32 %v912, 1.442695
        %v937 = vpow.pop %v936
        %v938 = vmul.f32 %v913, 1.442695
        %v939 = vpow.pop %v938
        %v940 = vmul.f32 %v914, 1.442695
        %v941 = vpow.pop %v940
        %v942 = vmul.f32 %v915, 1.442695
        %v943 = vpow.pop %v942
        %v944 = vmul.f32 %v916, 1.442695
        %v945 = vpow.pop %v944
        %v946 = vmul.f32 %v917, 1.442695
        %v947 = vpow.pop %v946
        %v948 = vmul.f32 %v918, 1.442695
        %v949 = vpow.pop %v948
        %v950 = vmul.f32 %v919, 1.442695
        %v951 = vpow.pop %v950
        %953 = vrot.lane.b32.xlu0 %v809, 120
        %v954 = vpop.permute.xlu0 %953
        %956 = vxpose.xlu0.b32.start [1/16] %v954, 128
        %957 = vxpose.xlu0.b32.cont [2/16] 0.0, 128
        %958 = vxpose.xlu0.b32.cont [3/16] 0.0, 128
        %959 = vxpose.xlu0.b32.cont [4/16] 0.0, 128
        %960 = vxpose.xlu0.b32.cont [5/16] 0.0, 128
        %961 = vxpose.xlu0.b32.cont [6/16] 0.0, 128
        %962 = vxpose.xlu0.b32.cont [7/16] 0.0, 128
        %963 = vxpose.xlu0.b32.cont [8/16] 0.0, 128
        %964 = vxpose.xlu0.b32.cont [9/16] 0.0, 128
        %965 = vxpose.xlu0.b32.cont [10/16] 0.0, 128
        %966 = vxpose.xlu0.b32.cont [11/16] 0.0, 128
        %967 = vxpose.xlu0.b32.cont [12/16] 0.0, 128
        %968 = vxpose.xlu0.b32.cont [13/16] 0.0, 128
        %969 = vxpose.xlu0.b32.cont [14/16] 0.0, 128
        %970 = vxpose.xlu0.b32.cont [15/16] 0.0, 128
        %971 = vxpose.xlu0.b32.end [16/16] 0.0, 128
        %v972 = vpop.trf.xlu0
        %v973 = vpop.trf.xlu0
        %v974 = vpop.trf.xlu0
        %v975 = vpop.trf.xlu0
        %v976 = vpop.trf.xlu0
        %v977 = vpop.trf.xlu0
        %v978 = vpop.trf.xlu0
        %v979 = vpop.trf.xlu0
        %v980 = vpop.trf.xlu0
        %v981 = vpop.trf.xlu0
        %v982 = vpop.trf.xlu0
        %v983 = vpop.trf.xlu0
        %v984 = vpop.trf.xlu0
        %v985 = vpop.trf.xlu0
        %v986 = vpop.trf.xlu0
        %v987 = vpop.trf.xlu0
        %989 = vrot.lane.b32.xlu0 %v835, 104
        %v990 = vpop.permute.xlu0 %989
        %992 = vxpose.xlu0.b32.start [1/16] %v990, 128
        %993 = vxpose.xlu0.b32.cont [2/16] 0.0, 128
        %994 = vxpose.xlu0.b32.cont [3/16] 0.0, 128
        %995 = vxpose.xlu0.b32.cont [4/16] 0.0, 128
        %996 = vxpose.xlu0.b32.cont [5/16] 0.0, 128
        %997 = vxpose.xlu0.b32.cont [6/16] 0.0, 128
        %998 = vxpose.xlu0.b32.cont [7/16] 0.0, 128
        %999 = vxpose.xlu0.b32.cont [8/16] 0.0, 128
        %1000 = vxpose.xlu0.b32.cont [9/16] 0.0, 128
        %1001 = vxpose.xlu0.b32.cont [10/16] 0.0, 128
        %1002 = vxpose.xlu0.b32.cont [11/16] 0.0, 128
        %1003 = vxpose.xlu0.b32.cont [12/16] 0.0, 128
        %1004 = vxpose.xlu0.b32.cont [13/16] 0.0, 128
        %1005 = vxpose.xlu0.b32.cont [14/16] 0.0, 128
        %1006 = vxpose.xlu0.b32.cont [15/16] 0.0, 128
        %1007 = vxpose.xlu0.b32.end [16/16] 0.0, 128
        %v1008 = vpop.trf.xlu0
        %v1009 = vpop.trf.xlu0
        %v1010 = vpop.trf.xlu0
        %v1011 = vpop.trf.xlu0
        %v1012 = vpop.trf.xlu0
        %v1013 = vpop.trf.xlu0
        %v1014 = vpop.trf.xlu0
        %v1015 = vpop.trf.xlu0
        %v1016 = vpop.trf.xlu0
        %v1017 = vpop.trf.xlu0
        %v1018 = vpop.trf.xlu0
        %v1019 = vpop.trf.xlu0
        %v1020 = vpop.trf.xlu0
        %v1021 = vpop.trf.xlu0
        %v1022 = vpop.trf.xlu0
        %v1023 = vpop.trf.xlu0
        %1025 = vset.pattern.permute.xlu0 0
        %1026 = vperm.xlu0 %1025, %v972
        %v1027 = vpop.permute.xlu0 %1026
        %1030 = vset.pattern.permute.xlu0 0
        %1031 = vperm.xlu0 %1030, %v973
        %v1032 = vpop.permute.xlu0 %1031
        %v1034 = vperm.slane %v877, 0
        %v1035 = vmul.f32 %v1027, %v1034
        %v1036 = vmul.f32 %v1032, %v1034
        %v1037 = vmul.f32 %v921, 0.0
        %v1038 = vmul.f32 %v923, 0.0
        %v1039 = vadd.f32 %v1037, %v1035
        %v1040 = vadd.f32 %v1038, %v1036
        %1042 = vset.pattern.permute.xlu0 0
        %1043 = vperm.xlu0 %1042, %v1008
        %v1044 = vpop.permute.xlu0 %1043
        %1047 = vset.pattern.permute.xlu0 0
        %1048 = vperm.xlu0 %1047, %v1009
        %v1049 = vpop.permute.xlu0 %1048
        %v1051 = vmul.f32 %v1044, %v1039
        %v1052 = vmul.f32 %v1049, %v1040
        %v1053 = vsel %vm728, %v1051, 0.0
        %v1054 = vsel %vm728, %v1052, 0.0
        %v1055 = vadd.f32 %v1053, %v1054
        %v1056 = vrot.slane %v1055, 4
        %v1057 = vadd.f32 %v1055, %v1056
        %v1058 = vrot.slane %v1057, 2
        %v1059 = vadd.f32 %v1057, %v1058
        %v1060 = vrot.slane %v1059, 1
        %v1061 = vadd.f32 %v1059, %v1060
        %vm1062 = vcmp.eq.s32.totalorder %v649, 0
        %v1063 = vsel %vm1062, %v1061, 0.0
        %v1064 = vadd.f32 %v1063, 0.0
        %1065 = vset.pattern.permute.xlu0 1
        %1066 = vperm.xlu0 %1065, %v972
        %v1067 = vpop.permute.xlu0 %1066
        %1069 = vset.pattern.permute.xlu0 1
        %1070 = vperm.xlu0 %1069, %v973
        %v1071 = vpop.permute.xlu0 %1070
        %v1073 = vperm.slane %v877, 1
        %v1074 = vmul.f32 %v1067, %v1073
        %v1075 = vmul.f32 %v1071, %v1073
        %v1076 = vmul.f32 %v925, %v1039
        %v1077 = vmul.f32 %v927, %v1040
        %v1078 = vadd.f32 %v1076, %v1074
        %v1079 = vadd.f32 %v1077, %v1075
        %1080 = vset.pattern.permute.xlu0 1
        %1081 = vperm.xlu0 %1080, %v1008
        %v1082 = vpop.permute.xlu0 %1081
        %1084 = vset.pattern.permute.xlu0 1
        %1085 = vperm.xlu0 %1084, %v1009
        %v1086 = vpop.permute.xlu0 %1085
        %v1088 = vmul.f32 %v1082, %v1078
        %v1089 = vmul.f32 %v1086, %v1079
        %v1090 = vsel %vm728, %v1088, 0.0
        %v1091 = vsel %vm728, %v1089, 0.0
        %v1092 = vadd.f32 %v1090, %v1091
        %v1093 = vrot.slane %v1092, 4
        %v1094 = vadd.f32 %v1092, %v1093
        %v1095 = vrot.slane %v1094, 2
        %v1096 = vadd.f32 %v1094, %v1095
        %v1097 = vrot.slane %v1096, 1
        %v1098 = vadd.f32 %v1096, %v1097
        %vm1099 = vcmp.eq.s32.totalorder %v649, 1
        %v1100 = vsel %vm1099, %v1098, 0.0
        %v1101 = vadd.f32 %v1064, %v1100
        %1102 = vset.pattern.permute.xlu0 2
        %1103 = vperm.xlu0 %1102, %v972
        %v1104 = vpop.permute.xlu0 %1103
        %1106 = vset.pattern.permute.xlu0 2
        %1107 = vperm.xlu0 %1106, %v973
        %v1108 = vpop.permute.xlu0 %1107
        %v1110 = vperm.slane %v877, 2
        %v1111 = vmul.f32 %v1104, %v1110
        %v1112 = vmul.f32 %v1108, %v1110
        %v1113 = vmul.f32 %v929, %v1078
        %v1114 = vmul.f32 %v931, %v1079
        %v1115 = vadd.f32 %v1113, %v1111
        %v1116 = vadd.f32 %v1114, %v1112
        %1117 = vset.pattern.permute.xlu0 2
        %1118 = vperm.xlu0 %1117, %v1008
        %v1119 = vpop.permute.xlu0 %1118
        %1121 = vset.pattern.permute.xlu0 2
        %1122 = vperm.xlu0 %1121, %v1009
        %v1123 = vpop.permute.xlu0 %1122
        %v1125 = vmul.f32 %v1119, %v1115
        %v1126 = vmul.f32 %v1123, %v1116
        %v1127 = vsel %vm728, %v1125, 0.0
        %v1128 = vsel %vm728, %v1126, 0.0
        %v1129 = vadd.f32 %v1127, %v1128
        %v1130 = vrot.slane %v1129, 4
        %v1131 = vadd.f32 %v1129, %v1130
        %v1132 = vrot.slane %v1131, 2
        %v1133 = vadd.f32 %v1131, %v1132
        %v1134 = vrot.slane %v1133, 1
        %v1135 = vadd.f32 %v1133, %v1134
        %vm1136 = vcmp.eq.s32.totalorder %v649, 2
        %v1137 = vsel %vm1136, %v1135, 0.0
        %v1138 = vadd.f32 %v1101, %v1137
        %1139 = vset.pattern.permute.xlu0 3
        %1140 = vperm.xlu0 %1139, %v972
        %v1141 = vpop.permute.xlu0 %1140
        %1143 = vset.pattern.permute.xlu0 3
        %1144 = vperm.xlu0 %1143, %v973
        %v1145 = vpop.permute.xlu0 %1144
        %v1147 = vperm.slane %v877, 3
        %v1148 = vmul.f32 %v1141, %v1147
        %v1149 = vmul.f32 %v1145, %v1147
        %v1150 = vmul.f32 %v933, %v1115
        %v1151 = vmul.f32 %v935, %v1116
        %v1152 = vadd.f32 %v1150, %v1148
        %v1153 = vadd.f32 %v1151, %v1149
        %1154 = vset.pattern.permute.xlu0 3
        %1155 = vperm.xlu0 %1154, %v1008
        %v1156 = vpop.permute.xlu0 %1155
        %1158 = vset.pattern.permute.xlu0 3
        %1159 = vperm.xlu0 %1158, %v1009
        %v1160 = vpop.permute.xlu0 %1159
        %v1162 = vmul.f32 %v1156, %v1152
        %v1163 = vmul.f32 %v1160, %v1153
        %v1164 = vsel %vm728, %v1162, 0.0
        %v1165 = vsel %vm728, %v1163, 0.0
        %v1166 = vadd.f32 %v1164, %v1165
        %v1167 = vrot.slane %v1166, 4
        %v1168 = vadd.f32 %v1166, %v1167
        %v1169 = vrot.slane %v1168, 2
        %v1170 = vadd.f32 %v1168, %v1169
        %v1171 = vrot.slane %v1170, 1
        %v1172 = vadd.f32 %v1170, %v1171
        %vm1173 = vcmp.eq.s32.totalorder %v649, 3
        %v1174 = vsel %vm1173, %v1172, 0.0
        %v1175 = vadd.f32 %v1138, %v1174
        %1176 = vset.pattern.permute.xlu0 4
        %1177 = vperm.xlu0 %1176, %v972
        %v1178 = vpop.permute.xlu0 %1177
        %1180 = vset.pattern.permute.xlu0 4
        %1181 = vperm.xlu0 %1180, %v973
        %v1182 = vpop.permute.xlu0 %1181
        %v1184 = vperm.slane %v877, 4
        %v1185 = vmul.f32 %v1178, %v1184
        %v1186 = vmul.f32 %v1182, %v1184
        %v1187 = vmul.f32 %v937, %v1152
        %v1188 = vmul.f32 %v939, %v1153
        %v1189 = vadd.f32 %v1187, %v1185
        %v1190 = vadd.f32 %v1188, %v1186
        %1191 = vset.pattern.permute.xlu0 4
        %1192 = vperm.xlu0 %1191, %v1008
        %v1193 = vpop.permute.xlu0 %1192
        %1195 = vset.pattern.permute.xlu0 4
        %1196 = vperm.xlu0 %1195, %v1009
        %v1197 = vpop.permute.xlu0 %1196
        %v1199 = vmul.f32 %v1193, %v1189
        %v1200 = vmul.f32 %v1197, %v1190
        %v1201 = vsel %vm728, %v1199, 0.0
        %v1202 = vsel %vm728, %v1200, 0.0
        %v1203 = vadd.f32 %v1201, %v1202
        %v1204 = vrot.slane %v1203, 4
        %v1205 = vadd.f32 %v1203, %v1204
        %v1206 = vrot.slane %v1205, 2
        %v1207 = vadd.f32 %v1205, %v1206
        %v1208 = vrot.slane %v1207, 1
        %v1209 = vadd.f32 %v1207, %v1208
        %vm1210 = vcmp.eq.s32.totalorder %v649, 4
        %v1211 = vsel %vm1210, %v1209, 0.0
        %v1212 = vadd.f32 %v1175, %v1211
        %1213 = vset.pattern.permute.xlu0 5
        %1214 = vperm.xlu0 %1213, %v972
        %v1215 = vpop.permute.xlu0 %1214
        %1217 = vset.pattern.permute.xlu0 5
        %1218 = vperm.xlu0 %1217, %v973
        %v1219 = vpop.permute.xlu0 %1218
        %v1221 = vperm.slane %v877, 5
        %v1222 = vmul.f32 %v1215, %v1221
        %v1223 = vmul.f32 %v1219, %v1221
        %v1224 = vmul.f32 %v941, %v1189
        %v1225 = vmul.f32 %v943, %v1190
        %v1226 = vadd.f32 %v1224, %v1222
        %v1227 = vadd.f32 %v1225, %v1223
        %1228 = vset.pattern.permute.xlu0 5
        %1229 = vperm.xlu0 %1228, %v1008
        %v1230 = vpop.permute.xlu0 %1229
        %1232 = vset.pattern.permute.xlu0 5
        %1233 = vperm.xlu0 %1232, %v1009
        %v1234 = vpop.permute.xlu0 %1233
        %v1236 = vmul.f32 %v1230, %v1226
        %v1237 = vmul.f32 %v1234, %v1227
        %v1238 = vsel %vm728, %v1236, 0.0
        %v1239 = vsel %vm728, %v1237, 0.0
        %v1240 = vadd.f32 %v1238, %v1239
        %v1241 = vrot.slane %v1240, 4
        %v1242 = vadd.f32 %v1240, %v1241
        %v1243 = vrot.slane %v1242, 2
        %v1244 = vadd.f32 %v1242, %v1243
        %v1245 = vrot.slane %v1244, 1
        %v1246 = vadd.f32 %v1244, %v1245
        %vm1247 = vcmp.eq.s32.totalorder %v649, 5
        %v1248 = vsel %vm1247, %v1246, 0.0
        %v1249 = vadd.f32 %v1212, %v1248
        %1250 = vset.pattern.permute.xlu0 6
        %1251 = vperm.xlu0 %1250, %v972
        %v1252 = vpop.permute.xlu0 %1251
        %1254 = vset.pattern.permute.xlu0 6
        %1255 = vperm.xlu0 %1254, %v973
        %v1256 = vpop.permute.xlu0 %1255
        %v1258 = vperm.slane %v877, 6
        %v1259 = vmul.f32 %v1252, %v1258
        %v1260 = vmul.f32 %v1256, %v1258
        %v1261 = vmul.f32 %v945, %v1226
        %v1262 = vmul.f32 %v947, %v1227
        %v1263 = vadd.f32 %v1261, %v1259
        %v1264 = vadd.f32 %v1262, %v1260
        %1265 = vset.pattern.permute.xlu0 6
        %1266 = vperm.xlu0 %1265, %v1008
        %v1267 = vpop.permute.xlu0 %1266
        %1269 = vset.pattern.permute.xlu0 6
        %1270 = vperm.xlu0 %1269, %v1009
        %v1271 = vpop.permute.xlu0 %1270
        %v1273 = vmul.f32 %v1267, %v1263
        %v1274 = vmul.f32 %v1271, %v1264
        %v1275 = vsel %vm728, %v1273, 0.0
        %v1276 = vsel %vm728, %v1274, 0.0
        %v1277 = vadd.f32 %v1275, %v1276
        %v1278 = vrot.slane %v1277, 4
        %v1279 = vadd.f32 %v1277, %v1278
        %v1280 = vrot.slane %v1279, 2
        %v1281 = vadd.f32 %v1279, %v1280
        %v1282 = vrot.slane %v1281, 1
        %v1283 = vadd.f32 %v1281, %v1282
        %vm1284 = vcmp.eq.s32.totalorder %v649, 6
        %v1285 = vsel %vm1284, %v1283, 0.0
        %v1286 = vadd.f32 %v1249, %v1285
        %1287 = vset.pattern.permute.xlu0 7
        %1288 = vperm.xlu0 %1287, %v972
        %v1289 = vpop.permute.xlu0 %1288
        %1291 = vset.pattern.permute.xlu0 7
        %1292 = vperm.xlu0 %1291, %v973
        %v1293 = vpop.permute.xlu0 %1292
        %v1295 = vperm.slane %v877, 7
        %v1296 = vmul.f32 %v1289, %v1295
        %v1297 = vmul.f32 %v1293, %v1295
        %v1298 = vmul.f32 %v949, %v1263
        %v1299 = vmul.f32 %v951, %v1264
        %v1300 = vadd.f32 %v1298, %v1296
        %v1301 = vadd.f32 %v1299, %v1297
        %1302 = vset.pattern.permute.xlu0 7
        %1303 = vperm.xlu0 %1302, %v1008
        %v1304 = vpop.permute.xlu0 %1303
        %1306 = vset.pattern.permute.xlu0 7
        %1307 = vperm.xlu0 %1306, %v1009
        %v1308 = vpop.permute.xlu0 %1307
        %v1310 = vmul.f32 %v1304, %v1300
        %v1311 = vmul.f32 %v1308, %v1301
        %v1312 = vsel %vm728, %v1310, 0.0
        %v1313 = vsel %vm728, %v1311, 0.0
        %v1314 = vadd.f32 %v1312, %v1313
        %v1315 = vrot.slane %v1314, 4
        %v1316 = vadd.f32 %v1314, %v1315
        %v1317 = vrot.slane %v1316, 2
        %v1318 = vadd.f32 %v1316, %v1317
        %v1319 = vrot.slane %v1318, 1
        %v1320 = vadd.f32 %v1318, %v1319
        %vm1321 = vcmp.eq.s32.totalorder %v649, 7
        %v1322 = vsel %vm1321, %v1320, 0.0
        %v1323 = vadd.f32 %v1286, %v1322
        %v1324 = vld [vmem:[%s13] sm:$0x1]
        %v1326 = vperm.slane %v1324, 0
        %v1328 = vmul.f32 %v1326, %v694
        %v1329 = vadd.f32 %v1323, %v1328
        %v1330 = vxor.u32 %v644, 2147483648
        %v1331 = vmul.f32 %v1330, 1.442695
        %v1332 = vpow.pop %v1331
        %v1333 = vadd.f32 %v1332, 1.0
        %v1334 = vrcp.pop %v1333
        %v1335 = vmul.f32 %v1333, %v1334
        %v1336 = vsub.f32 1.0, %v1335
        %v1337 = vmul.f32 %v1334, %v1336
        %v1338 = vadd.f32 %v1334, %v1337
        %vm1339 = vweird.f32 %v1333
        %vm1340 = vweird.f32 %v1334
        %vm1341 = vmor %vm1339, %vm1340
        %v1342 = vsel %vm1341, %v1334, %v1338
        %v1343 = vand.u32 2147483647, %v1333
        %vm1344 = vcmp.eq.f32.partialorder %v1343, 8.507059e+37
        %v1345 = vand.u32 %v1333, 2147483648
        %v1346 = vor.u32 1.1754944e-38, %v1345
        %v1347 = vsel %vm1344, %v1346, %v1342
        %v1348 = vmul.f32 1.0, %v1347
        %v1349 = vmul.f32 %v644, %v1348
        %1351 = vrot.lane.b32.xlu0 %v1349, 64
        %v1352 = vpop.permute.xlu0 %1351
        %v1354 = vmul.f32 %v1329, %v1352
        %v1355 = vld [vmem:[%s14] sm:$0xf]
        %v1356 = vld [vmem:[%s14 + $0x4] sm:$0xf]
        %v1357 = vld [vmem:[%s14 + $0x8] sm:$0xf]
        %v1358 = vld [vmem:[%s14 + $0xc] sm:$0xf]
        %v1359 = vld [vmem:[%s14 + $0x10] sm:$0xf]
        %v1360 = vld [vmem:[%s14 + $0x14] sm:$0xf]
        %v1361 = vld [vmem:[%s14 + $0x18] sm:$0xf]
        %v1362 = vld [vmem:[%s14 + $0x1c] sm:$0xf]
        %v1363 = vpack.c.bf16 %v1354, %v1354
        %v1372 = vunpack.c.l.b16 %v1355
        %v1373 = vunpack.c.l.b16 %v1356
        %v1374 = vunpack.c.l.b16 %v1357
        %v1375 = vunpack.c.l.b16 %v1358
        %v1376 = vunpack.c.l.b16 %v1359
        %v1377 = vunpack.c.l.b16 %v1360
        %v1378 = vunpack.c.l.b16 %v1361
        %v1379 = vunpack.c.l.b16 %v1362
        %v1380 = vpack.c.b16 %v1373, %v1372
        %v1381 = vpack.c.b16 %v1375, %v1374
        %v1382 = vpack.c.b16 %v1377, %v1376
        %v1383 = vpack.c.b16 %v1379, %v1378
        %v1389 = vsel %vm728, %v1363, 0
        %1391 = vmatpush.bf16.msra.mxu0 0
        %1392 = vmatpush.bf16.msra.mxu0 0
        %1393 = vmatpush.bf16.msra.mxu0 0
        %1394 = vmatpush.bf16.msra.mxu0 0
        %1395 = vmatpush.bf16.msra.mxu0 %v1383
        %1396 = vmatpush.bf16.msra.mxu0 %v1382
        %1397 = vmatpush.bf16.msra.mxu0 %v1381
        %1398 = vmatpush.bf16.msra.mxu0 %v1380
        %1399 = vmatmul.bf16.gmra.mxu0 %v1389
        %v1400 = vpop.f32.mrf.mxu0
        %v1401 = vadd.f32 %v583, %v1400
        %v1402 = vpop.f32.mrf.mxu0
        %1403 = vdwg.mxu0
        %1404 = vst.msk [vmem:[%s577] sm:$0xff] %vm586, %v1401
        %v1405 = vld [vmem:[%s2] sm:$0x1]
        %v1406 = vmul.f32 %v1401, %v1401
        %v1407 = vsel %vm586, %v1406, 0.0
        %1408 = vadd.xlane.f32.xlu0 %v1407
        %v1409 = vpop.xlane.xlu0 %1408
        %v1410 = vmul.f32 %v1409, %v596
        %v1411 = vadd.f32 %v1410, 1e-06
        %v1412 = vrsqrt.pop %v1411
        %v1413 = vmul.f32 %v1412, %v1411
        %v1414 = vmul.f32 %v1413, %v1412
        %v1415 = vmul.f32 0.5, %v1414
        %v1416 = vsub.f32 1.5, %v1415
        %v1417 = vmul.f32 %v1412, %v1416
        %vm1418 = vweird.f32 %v1411
        %vm1419 = vweird.f32 %v1412
        %vm1420 = vmor %vm1418, %vm1419
        %v1421 = vsel %vm1420, %v1412, %v1417
        %v1422 = vmul.f32 %v1401, %v1421
        %v1424 = vperm.slane %v1405, 0
        %v1426 = vmul.f32 %v1422, %v1424
        %v1427 = vld [vmem:[%s15] sm:$0xf]
        %v1428 = vld [vmem:[%s15 + $0x4] sm:$0xf]
        %v1429 = vld [vmem:[%s15 + $0x8] sm:$0xf]
        %v1430 = vld [vmem:[%s15 + $0xc] sm:$0xf]
        %v1431 = vpack.c.bf16 %v1426, %v1426
        %v1436 = vunpack.c.l.b16 %v1427
        %v1437 = vunpack.c.l.b16 %v1428
        %v1438 = vunpack.c.l.b16 %v1429
        %v1439 = vunpack.c.l.b16 %v1430
        %v1440 = vpack.c.b16 %v1437, %v1436
        %v1441 = vpack.c.b16 %v1439, %v1438
        %v1445 = vsel %vm586, %v1431, 0
        %1447 = vmatpush.bf16.msra.mxu0 0
        %1448 = vmatpush.bf16.msra.mxu0 0
        %1449 = vmatpush.bf16.msra.mxu0 0
        %1450 = vmatpush.bf16.msra.mxu0 0
        %1451 = vmatpush.bf16.msra.mxu0 0
        %1452 = vmatpush.bf16.msra.mxu0 0
        %1453 = vmatpush.bf16.msra.mxu0 %v1441
        %1454 = vmatpush.bf16.msra.mxu0 %v1440
        %1455 = vmatmul.bf16.gmra.mxu0 %v1445
        %v1456 = vpop.f32.mrf.mxu0
        %v1457 = vadd.f32 0.0, %v1456
        %v1458 = vpop.f32.mrf.mxu0
        %1459 = vdwg.mxu0
        %v1460 = vxor.u32 %v1457, 2147483648
        %v1461 = vmul.f32 %v1460, 1.442695
        %v1462 = vpow.pop %v1461
        %v1463 = vadd.f32 %v1462, 1.0
        %v1464 = vrcp.pop %v1463
        %v1465 = vmul.f32 %v1463, %v1464
        %v1466 = vsub.f32 1.0, %v1465
        %v1467 = vmul.f32 %v1464, %v1466
        %v1468 = vadd.f32 %v1464, %v1467
        %vm1469 = vweird.f32 %v1463
        %vm1470 = vweird.f32 %v1464
        %vm1471 = vmor %vm1469, %vm1470
        %v1472 = vsel %vm1471, %v1464, %v1468
        %v1473 = vand.u32 2147483647, %v1463
        %vm1474 = vcmp.eq.f32.partialorder %v1473, 8.507059e+37
        %v1475 = vand.u32 %v1463, 2147483648
        %v1476 = vor.u32 1.1754944e-38, %v1475
        %v1477 = vsel %vm1474, %v1476, %v1472
        %v1478 = vmul.f32 1.0, %v1477
        %v1479 = vmul.f32 %v1457, %v1478
        %1481 = vrot.lane.b32.xlu0 %v1457, 64
        %v1482 = vpop.permute.xlu0 %1481
        %v1484 = vmul.f32 %v1479, %v1482
        %v1485 = vld [vmem:[%s16] sm:$0xf]
        %v1486 = vld [vmem:[%s16 + $0x4] sm:$0xf]
        %v1487 = vld [vmem:[%s16 + $0x8] sm:$0xf]
        %v1488 = vld [vmem:[%s16 + $0xc] sm:$0xf]
        %v1489 = vld [vmem:[%s16 + $0x10] sm:$0xf]
        %v1490 = vld [vmem:[%s16 + $0x14] sm:$0xf]
        %v1491 = vld [vmem:[%s16 + $0x18] sm:$0xf]
        %v1492 = vld [vmem:[%s16 + $0x1c] sm:$0xf]
        %v1493 = vpack.c.bf16 %v1484, %v1484
        %v1502 = vunpack.c.l.b16 %v1485
        %v1503 = vunpack.c.l.b16 %v1486
        %v1504 = vunpack.c.l.b16 %v1487
        %v1505 = vunpack.c.l.b16 %v1488
        %v1506 = vunpack.c.l.b16 %v1489
        %v1507 = vunpack.c.l.b16 %v1490
        %v1508 = vunpack.c.l.b16 %v1491
        %v1509 = vunpack.c.l.b16 %v1492
        %v1510 = vpack.c.b16 %v1503, %v1502
        %v1511 = vpack.c.b16 %v1505, %v1504
        %v1512 = vpack.c.b16 %v1507, %v1506
        %v1513 = vpack.c.b16 %v1509, %v1508
        %v1519 = vsel %vm728, %v1493, 0
        %1521 = vmatpush.bf16.msra.mxu0 0
        %1522 = vmatpush.bf16.msra.mxu0 0
        %1523 = vmatpush.bf16.msra.mxu0 0
        %1524 = vmatpush.bf16.msra.mxu0 0
        %1525 = vmatpush.bf16.msra.mxu0 %v1513
        %1526 = vmatpush.bf16.msra.mxu0 %v1512
        %1527 = vmatpush.bf16.msra.mxu0 %v1511
        %1528 = vmatpush.bf16.msra.mxu0 %v1510
        %1529 = vmatmul.bf16.gmra.mxu0 %v1519
        %v1530 = vpop.f32.mrf.mxu0
        %v1531 = vadd.f32 0.0, %v1530
        %v1532 = vpop.f32.mrf.mxu0
        %1533 = vdwg.mxu0
        %1534 = vst.msk [vmem:[%s570] sm:$0xff] %vm586, %v1531
        %s1535 = sand.u32 %s406, 1
        %s1536 = scalar_lea.sflag [#allocation3], %s1535
        %s1537 = sand.u32 %s406, 1
        %s1538 = smul.addr %s1537, 8
        %s1539 = scalar_lea.vmem [#allocation2], %s1538
        %s1540 = sand.u32 %s432, 1
        %s1541 = scalar_lea.sflag [#allocation5], %s1540
        %s1542 = sand.u32 %s432, 1
        %s1543 = smul.addr %s1542, 8
        %s1544 = scalar_lea.vmem [#allocation4], %s1543
        // Predicated region
        $region89: #{tpu_custom_call.1} parent=87 // pred_check
          %p1545 = pneg %p416
        $region90: #{tpu_custom_call.1} parent=87 // pred_check_branch
          %1547 = sbr.rel (%p1545) target = $region92
        $region91: #{tpu_custom_call.1} parent=87 // pred_region
          %1549 = vsyncadd %s1536, 0
          %s1550 = smul.addr %s36, 8
          %s1551 = scalar_lea.hbm %s17, %s1550
          %s1553 = sshll.u32 %s1539, 4
          %s1554 = int_to_ptr.vmem [resolvable:$true] %s1553
          %s1555 = sshll.u32 %s1551, 4
          %s1556 = int_to_ptr.hbm [resolvable:$true] %s1555
          %1558 = dma.vmem_to_hbm [thread:$0]  %s1554, 128, %s1556, %s1536
        $region92: #{tpu_custom_call.1} parent=87 // pred_fallthru
          _
        // Predicated region
        $region93: #{tpu_custom_call.1} parent=87 // pred_check
          %p1559 = pneg %p442
        $region94: #{tpu_custom_call.1} parent=87 // pred_check_branch
          %1561 = sbr.rel (%p1559) target = $region96
        $region95: #{tpu_custom_call.1} parent=87 // pred_region
          %1563 = vsyncadd %s1541, 0
          %s1564 = smul.addr %s36, 8
          %s1565 = scalar_lea.hbm %s18, %s1564
          %s1567 = sshll.u32 %s1544, 4
          %s1568 = int_to_ptr.vmem [resolvable:$true] %s1567
          %s1569 = sshll.u32 %s1565, 4
          %s1570 = int_to_ptr.hbm [resolvable:$true] %s1569
          %1572 = dma.vmem_to_hbm [thread:$0]  %s1568, 128, %s1570, %s1541
        $region96: #{tpu_custom_call.1} parent=87 // pred_fallthru
          _
      $region88: #{tpu_custom_call.1} parent=5 // pred_fallthru
        _
      %p1573 = scmp.le.s32.totalorder 2, %s31
      // Predicated region
      $region97: #{tpu_custom_call.1} parent=5 // pred_check
        %p1574 = pneg %p1573
      $region98: #{tpu_custom_call.1} parent=5 // pred_check_branch
        %1576 = sbr.rel (%p1574) target = $region100
      $region99: #{tpu_custom_call.1} parent=5 // pred_region
        %s1577 = ssub.s32 %s31, 2
        // Predicated region
        $region101: #{tpu_custom_call.1} parent=99 // pred_check
          %p1578 = pneg %p422
        $region102: #{tpu_custom_call.1} parent=99 // pred_check_branch
          %1580 = sbr.rel (%p1578) target = $region104
        $region103: #{tpu_custom_call.1} parent=99 // pred_region
          %s1581 = sand.u32 %s407, 1
          %s1582 = scalar_lea.sflag [#allocation3], %s1581
          %s1583 = sand.u32 %s407, 1
          %s1584 = smul.addr %s1583, 8
          %s1585 = scalar_lea.vmem [#allocation2], %s1584
          %1587 = dma.done %s1582, 128
        $region104: #{tpu_custom_call.1} parent=99 // pred_fallthru
          _
        // Predicated region
        $region105: #{tpu_custom_call.1} parent=99 // pred_check
          %p1588 = pneg %p448
        $region106: #{tpu_custom_call.1} parent=99 // pred_check_branch
          %1590 = sbr.rel (%p1588) target = $region108
        $region107: #{tpu_custom_call.1} parent=99 // pred_region
          %s1591 = sand.u32 %s433, 1
          %s1592 = scalar_lea.sflag [#allocation5], %s1591
          %s1593 = sand.u32 %s433, 1
          %s1594 = smul.addr %s1593, 8
          %s1595 = scalar_lea.vmem [#allocation4], %s1594
          %1597 = dma.done %s1592, 128
        $region108: #{tpu_custom_call.1} parent=99 // pred_fallthru
          _
      $region100: #{tpu_custom_call.1} parent=5 // pred_fallthru
        _
    $region6: #{tpu_custom_call.1} parent=1 // loop_footer
      %s35 = sadd.s32 1, %s31
    $region7: #{tpu_custom_call.1} parent=1 // loop_footer_branch
      %30 = sbr.rel target = $region3
    $region8: #{tpu_custom_call.1} parent=1 // loop_exit
      _
    %1598 = vsyncpa [#allocation3], 1
    %s1599 = scalar_lea.sflag [#allocation3], 1
    %1600 = vsyncpa %s1599, 1
    %1601 = vsyncpa [#allocation5], 1
    %s1602 = scalar_lea.sflag [#allocation5], 1
    %1603 = vsyncpa %s1602, 1

</llo_original>
